<compile_context>
chip_gen: v6e
topology: v6e:2x2x1
jax: 0.10.0
libtpu: 0.0.40
codegen_flags: <defaults>
</compile_context>

<pallas_src>
import math
from functools import partial

import jax
import jax.numpy as jnp
from jax.experimental import pallas as pl
from jax.experimental.pallas import tpu as pltpu


# ----------------------------- config ---------------------------------------
CONFIG = dict(
    d_model=32,
    num_heads=4,
    context_len=8,
    hidden_size_multiplier=4,
    eps=1e-5,
    dropout=0.0,          # identity (eval mode)
    qkv_bias=True,
)
NEG_INF = -100000.0        # matches SelfAttentionLayer.neg_inf


# --------------------------- in-kernel helpers -------------------------------
def _erf(x):
    # Abramowitz & Stegun 7.1.26 rational approximation, |err| <= 1.5e-7.
    # TODO(synk): exact erf primitive replaced by f32-accurate approximation.
    a1, a2, a3, a4, a5 = (0.254829592, -0.284496736, 1.421413741,
                          -1.453152027, 1.061405429)
    p = 0.3275911
    sgn = jnp.where(x >= 0.0, 1.0, -1.0)
    ax = jnp.abs(x)
    # approx=True: fast EUP path; error is far below the poly's intrinsic error
    t = pl.reciprocal(1.0 + p * ax, approx=True)
    poly = t * (a1 + t * (a2 + t * (a3 + t * (a4 + t * a5))))
    return sgn * (1.0 - poly * jnp.exp(-ax * ax))


def _gelu_exact(x):
    # PyTorch nn.GELU() default: 0.5 * x * (1 + erf(x / sqrt(2)))
    return 0.5 * x * (1.0 + _erf(x * (1.0 / math.sqrt(2.0))))


def _layer_norm(x, scale, shift, eps):
    # Matches LayerNormalization: torch.std is UNBIASED (divides by D-1),
    # and the denominator is (std + eps), not sqrt(var + eps).
    d = x.shape[-1]
    mean = jnp.mean(x, axis=-1, keepdims=True)
    var = jnp.sum((x - mean) ** 2, axis=-1, keepdims=True) * (1.0 / (d - 1))
    std = jnp.sqrt(var)
    inv = pl.reciprocal(std + eps, approx=False)     # exact, for parity
    return (x - mean) * inv * scale + shift


# ------------------------------- kernel --------------------------------------
def transformer_block_kernel(
    x_ref,          # (bt, S, D) activation block (streamed)
    vec_ref,        # (8, D): ln1_s, ln1_b, ln2_s, ln2_b, bo, b2, pad, pad
    wqkv_ref,       # (D, 3D)  -- Q columns pre-scaled by 1/sqrt(h_dim)
    bqkv_ref,       # (1, 3D)
    wo_ref,         # (D, D)
    w1_ref,         # (D, H)
    b1_ref,         # (1, H)
    w2_ref,         # (H, D)
    o_ref,          # (bt, S, D)
    *, num_heads, eps,
):
    bt, seq, d_model = x_ref.shape
    rows = bt * seq
    h_dim = d_model // num_heads

    ln1_scale = vec_ref[0:1, :]
    ln1_shift = vec_ref[1:2, :]
    ln2_scale = vec_ref[2:3, :]
    ln2_shift = vec_ref[3:4, :]
    bo        = vec_ref[4:5, :]
    b2        = vec_ref[5:6, :]

    x = x_ref[...].reshape(rows, d_model)            # (R, D) fp32

    # ---- LN1 ----
    xn = _layer_norm(x, ln1_scale, ln1_shift, eps)

    # ---- fused QKV projection: one (R,D)@(D,3D) MXU push (Q pre-scaled) ----
    qkv = jnp.dot(xn, wqkv_ref[...],
                  preferred_element_type=jnp.float32) + bqkv_ref[...]

    # ---- head-batched attention: stack head slices along sublanes and do
    #      ONE batched matmul for scores and ONE for context vectors ----
    q_heads = [qkv[:, h * h_dim:(h + 1) * h_dim] for h in range(num_heads)]
    k_heads = [qkv[:, d_model + h * h_dim: d_model + (h + 1) * h_dim]
               for h in range(num_heads)]
    v_heads = [qkv[:, 2 * d_model + h * h_dim: 2 * d_model + (h + 1) * h_dim]
               for h in range(num_heads)]
    nb = num_heads * bt
    qs = jnp.concatenate(q_heads, axis=0).reshape(nb, seq, h_dim)
    ks = jnp.concatenate(k_heads, axis=0).reshape(nb, seq, h_dim)
    vs = jnp.concatenate(v_heads, axis=0).reshape(nb, seq, h_dim)

    scores = jnp.einsum('bqd,bkd->bqk', qs, ks,
                        preferred_element_type=jnp.float32)   # (nb, S, S)

    # causal additive mask generated in-kernel (no HBM traffic)
    row_ids = jax.lax.broadcasted_iota(jnp.int32, (seq, seq), 0)
    col_ids = jax.lax.broadcasted_iota(jnp.int32, (seq, seq), 1)
    mask_add = jnp.where(col_ids <= row_ids, 0.0, NEG_INF).astype(jnp.float32)
    scores = scores + mask_add[None, :, :]

    m = jnp.max(scores, axis=-1, keepdims=True)
    p = jnp.exp(scores - m)
    # exact normalization (parity with torch.softmax)
    probs = p * pl.reciprocal(jnp.sum(p, axis=-1, keepdims=True), approx=False)

    ctx = jnp.einsum('bqk,bkd->bqd', probs, vs,
                     preferred_element_type=jnp.float32)      # (nb, S, hd)
    ctx = ctx.reshape(num_heads * rows, h_dim)
    # reassemble (R, D) with head h occupying lanes [h*hd:(h+1)*hd]
    ctx = jnp.concatenate(
        [ctx[h * rows:(h + 1) * rows, :] for h in range(num_heads)], axis=1)

    # ---- single output projection ----
    attn_out = jnp.dot(ctx, wo_ref[...],
                       preferred_element_type=jnp.float32) + bo

    # ---- residual 1 (dropout = identity) ----
    x1 = x + attn_out

    # ---- LN2 + feed-forward ----
    x2 = _layer_norm(x1, ln2_scale, ln2_shift, eps)
    hdn = jnp.dot(x2, w1_ref[...],
                  preferred_element_type=jnp.float32) + b1_ref[...]
    hdn = _gelu_exact(hdn)
    ff = jnp.dot(hdn, w2_ref[...],
                 preferred_element_type=jnp.float32) + b2

    # ---- residual 2 (dropout = identity) ----
    o_ref[...] = (ff + x1).reshape(bt, seq, d_model).astype(o_ref.dtype)


# ------------------------------ wrapper ---------------------------------------
def init_params(key, config):
    d = config["d_model"]
    hdim = config["hidden_size_multiplier"] * d
    keys = jax.random.split(key, 8)
    s = 0.05
    p = {
        "ln1_scale": jnp.ones((1, d), jnp.float32),
        "ln1_shift": jnp.zeros((1, d), jnp.float32),
        "wq": s * jax.random.normal(keys[0], (d, d), jnp.float32),
        "bq": s * jax.random.normal(keys[1], (1, d), jnp.float32),
        "wk": s * jax.random.normal(keys[2], (d, d), jnp.float32),
        "bk": s * jax.random.normal(keys[3], (1, d), jnp.float32),
        "wv": s * jax.random.normal(keys[4], (d, d), jnp.float32),
        "bv": s * jax.random.normal(keys[5], (1, d), jnp.float32),
        "wo": s * jax.random.normal(keys[6], (d, d), jnp.float32),
        "bo": jnp.zeros((1, d), jnp.float32),
        "ln2_scale": jnp.ones((1, d), jnp.float32),
        "ln2_shift": jnp.zeros((1, d), jnp.float32),
        "w1": s * jax.random.normal(keys[7], (d, hdim), jnp.float32),
        "b1": jnp.zeros((1, hdim), jnp.float32),
        "w2": s * jax.random.normal(jax.random.fold_in(key, 99), (hdim, d),
                                    jnp.float32),
        "b2": jnp.zeros((1, d), jnp.float32),
    }
    if not config["qkv_bias"]:
        p["bq"] = jnp.zeros_like(p["bq"])
        p["bk"] = jnp.zeros_like(p["bk"])
        p["bv"] = jnp.zeros_like(p["bv"])
    return p


def _pick_batch_tile(batch, seq):
    # Target ~>=256 rows per grid step (MXU fill), but keep >=2 parallel grid
    # steps when batch >= 2 so both v7x TensorCores get work.
    bt = max(1, min(batch, 256 // max(seq, 1)))
    if batch >= 2 and batch // bt < 2:
        bt = max(1, batch // 2)
    while batch % bt != 0:
        bt -= 1
    return bt


@partial(jax.jit, static_argnames=("num_heads", "eps"))
def transformer_block(x, params, *, num_heads, eps):
    B, S, D = x.shape
    hdim = params["w1"].shape[1]
    h_dim = D // num_heads
    inv_sqrt_hd = 1.0 / math.sqrt(h_dim)

    # fold 1/sqrt(h_dim) into the Q projection (free at runtime)
    wqkv = jnp.concatenate(
        [params["wq"] * inv_sqrt_hd, params["wk"], params["wv"]], axis=1)
    bqkv = jnp.concatenate(
        [params["bq"] * inv_sqrt_hd, params["bk"], params["bv"]], axis=1)
    vec32 = jnp.concatenate(
        [params["ln1_scale"], params["ln1_shift"],
         params["ln2_scale"], params["ln2_shift"],
         params["bo"], params["b2"],
         jnp.zeros((2, D), jnp.float32)], axis=0)        # pad to 8 sublanes

    bt = _pick_batch_tile(B, S)
    nblk = B // bt

    def const_spec(shape):
        # constant index_map -> weight block stays resident across grid steps
        return pl.BlockSpec(shape, lambda b: (0, 0))

    grid_spec = pltpu.PrefetchScalarGridSpec(
        num_scalar_prefetch=0,
        grid=(nblk,),
        in_specs=[
            pl.BlockSpec((bt, S, D), lambda b: (b, 0, 0)),   # activations streamed
            const_spec((8, D)),
            const_spec((D, 3 * D)),
            const_spec((1, 3 * D)),
            const_spec((D, D)),
            const_spec((D, hdim)),
            const_spec((1, hdim)),
            const_spec((hdim, D)),
        ],
        out_specs=pl.BlockSpec((bt, S, D), lambda b: (b, 0, 0)),
    )

    out = pl.pallas_call(
        partial(transformer_block_kernel, num_heads=num_heads, eps=eps),
        out_shape=jax.ShapeDtypeStruct((B, S, D), x.dtype),
        grid_spec=grid_spec,
        compiler_params=pltpu.CompilerParams(
            dimension_semantics=("parallel",)),
    )(x, vec32, wqkv, bqkv,
      params["wo"], params["w1"], params["b1"], params["w2"])
    return out


# -------------------------- pure-JAX reference --------------------------------
def transformer_block_ref(x, params, *, num_heads, eps):
    B, S, D = x.shape
    h_dim = D // num_heads

    def layer_norm(t, scale, shift):
        mean = jnp.mean(t, axis=-1, keepdims=True)
        var = jnp.sum((t - mean) ** 2, axis=-1, keepdims=True) / (D - 1)
        std = jnp.sqrt(var)
        return (t - mean) / (std + eps) * scale + shift

    xn = layer_norm(x, params["ln1_scale"], params["ln1_shift"])
    q = xn @ params["wq"] + params["bq"]
    k = xn @ params["wk"] + params["bk"]
    v = xn @ params["wv"] + params["bv"]
    q = q.reshape(B, S, num_heads, h_dim).transpose(0, 2, 1, 3)
    k = k.reshape(B, S, num_heads, h_dim).transpose(0, 2, 1, 3)
    v = v.reshape(B, S, num_heads, h_dim).transpose(0, 2, 1, 3)
    scores = (q @ jnp.swapaxes(k, -1, -2)) / math.sqrt(h_dim)
    mask = jnp.triu(jnp.ones((S, S), dtype=bool), k=1)
    scores = jnp.where(mask, NEG_INF, scores)
    probs = jax.nn.softmax(scores, axis=-1)
    ctx = (probs @ v).transpose(0, 2, 1, 3).reshape(B, S, D)
    attn = ctx @ params["wo"] + params["bo"]
    x1 = x + attn
    x2 = layer_norm(x1, params["ln2_scale"], params["ln2_shift"])
    h1 = jax.nn.gelu(x2 @ params["w1"] + params["b1"], approximate=False)
    ff = h1 @ params["w2"] + params["b2"]
    return ff + x1


# -------------------------------- main ----------------------------------------
if __name__ == "__main__":
    cfg = CONFIG
    B, S, D = 2, cfg["context_len"], cfg["d_model"]

    key = jax.random.PRNGKey(0)
    k_x, k_p = jax.random.split(key)
    x = jax.random.normal(k_x, (B, S, D), jnp.float32)
    params = init_params(k_p, cfg)

    out = transformer_block(x, params,
                            num_heads=cfg["num_heads"], eps=cfg["eps"])
    jax.block_until_ready(out)
    assert out.shape == (B, S, D) and out.dtype == jnp.float32

    ref = transformer_block_ref(x, params,
                                num_heads=cfg["num_heads"], eps=cfg["eps"])
    max_err = float(jnp.max(jnp.abs(out - ref)))
    assert max_err < 5e-3, f"kernel/ref mismatch: max abs err {max_err}"

    print("KERNEL_OK")
</pallas_src>

<mosaic_0001>
module attributes {stable_mosaic.version = 11 : i64} {
  func.func @transformer_block_kernel(%arg0: i32, %arg1: memref<1x8x32xf32, #tpu.memory_space<vmem>>, %arg2: memref<8x32xf32, #tpu.memory_space<vmem>>, %arg3: memref<32x96xf32, #tpu.memory_space<vmem>>, %arg4: memref<1x96xf32, #tpu.memory_space<vmem>>, %arg5: memref<32x32xf32, #tpu.memory_space<vmem>>, %arg6: memref<32x128xf32, #tpu.memory_space<vmem>>, %arg7: memref<1x128xf32, #tpu.memory_space<vmem>>, %arg8: memref<128x32xf32, #tpu.memory_space<vmem>>, %arg9: memref<1x8x32xf32, #tpu.memory_space<vmem>>) attributes {dimension_semantics = [#tpu.dimension_semantics<parallel>], iteration_bounds = array<i64: 2>, scalar_prefetch = 0 : i64, scratch_operands = 0 : i64, tpu.core_type = #tpu.core_type<tc>, window_params = [{transform_indices = @transform_0, window_bounds = array<i64: 1, 8, 32>}, {pipeline_mode = #tpu.pipeline_mode<synchronous>, transform_indices = @transform_1, window_bounds = array<i64: 8, 32>}, {pipeline_mode = #tpu.pipeline_mode<synchronous>, transform_indices = @transform_2, window_bounds = array<i64: 32, 96>}, {pipeline_mode = #tpu.pipeline_mode<synchronous>, transform_indices = @transform_3, window_bounds = array<i64: 1, 96>}, {pipeline_mode = #tpu.pipeline_mode<synchronous>, transform_indices = @transform_4, window_bounds = array<i64: 32, 32>}, {pipeline_mode = #tpu.pipeline_mode<synchronous>, transform_indices = @transform_5, window_bounds = array<i64: 32, 128>}, {pipeline_mode = #tpu.pipeline_mode<synchronous>, transform_indices = @transform_6, window_bounds = array<i64: 1, 128>}, {pipeline_mode = #tpu.pipeline_mode<synchronous>, transform_indices = @transform_7, window_bounds = array<i64: 128, 32>}, {transform_indices = @transform_8, window_bounds = array<i64: 1, 8, 32>}]} {
    %c0 = arith.constant 0 : index
    %c0_0 = arith.constant 0 : index
    %0 = vector.load %arg2[%c0, %c0_0] : memref<8x32xf32, #tpu.memory_space<vmem>>, vector<1x32xf32>
    %c1 = arith.constant 1 : index
    %c0_1 = arith.constant 0 : index
    %1 = vector.load %arg2[%c1, %c0_1] : memref<8x32xf32, #tpu.memory_space<vmem>>, vector<1x32xf32>
    %c2 = arith.constant 2 : index
    %c0_2 = arith.constant 0 : index
    %2 = vector.load %arg2[%c2, %c0_2] : memref<8x32xf32, #tpu.memory_space<vmem>>, vector<1x32xf32>
    %c3 = arith.constant 3 : index
    %c0_3 = arith.constant 0 : index
    %3 = vector.load %arg2[%c3, %c0_3] : memref<8x32xf32, #tpu.memory_space<vmem>>, vector<1x32xf32>
    %c4 = arith.constant 4 : index
    %c0_4 = arith.constant 0 : index
    %4 = vector.load %arg2[%c4, %c0_4] : memref<8x32xf32, #tpu.memory_space<vmem>>, vector<1x32xf32>
    %c5 = arith.constant 5 : index
    %c0_5 = arith.constant 0 : index
    %5 = vector.load %arg2[%c5, %c0_5] : memref<8x32xf32, #tpu.memory_space<vmem>>, vector<1x32xf32>
    %c0_6 = arith.constant 0 : index
    %c0_7 = arith.constant 0 : index
    %c0_8 = arith.constant 0 : index
    %6 = vector.load %arg1[%c0_6, %c0_7, %c0_8] : memref<1x8x32xf32, #tpu.memory_space<vmem>>, vector<1x8x32xf32>
    %7 = vector.shape_cast %6 : vector<1x8x32xf32> to vector<8x32xf32>
    %cst = arith.constant dense<0.000000e+00> : vector<8xf32>
    %8 = vector.multi_reduction <add>, %7, %cst [1] : vector<8x32xf32> to vector<8xf32>
    %9 = vector.shape_cast %8 : vector<8xf32> to vector<8x1xf32>
    %cst_9 = arith.constant 3.200000e+01 : f32
    %10 = vector.broadcast %cst_9 : f32 to vector<8x1xf32>
    %11 = arith.divf %9, %10 : vector<8x1xf32>
    %12 = vector.broadcast %11 : vector<8x1xf32> to vector<8x32xf32>
    %13 = arith.subf %7, %12 : vector<8x32xf32>
    %14 = arith.mulf %13, %13 : vector<8x32xf32>
    %cst_10 = arith.constant dense<0.000000e+00> : vector<8xf32>
    %15 = vector.multi_reduction <add>, %14, %cst_10 [1] : vector<8x32xf32> to vector<8xf32>
    %16 = vector.shape_cast %15 : vector<8xf32> to vector<8x1xf32>
    %cst_11 = arith.constant 0.0322580636 : f32
    %17 = vector.broadcast %cst_11 : f32 to vector<8x1xf32>
    %18 = arith.mulf %16, %17 : vector<8x1xf32>
    %19 = math.sqrt %18 : vector<8x1xf32>
    %cst_12 = arith.constant 9.99999974E-6 : f32
    %20 = vector.broadcast %cst_12 : f32 to vector<8x1xf32>
    %21 = arith.addf %19, %20 : vector<8x1xf32>
    %22 = tpu.reciprocal %21 : vector<8x1xf32> -> vector<8x1xf32>
    %23 = vector.broadcast %11 : vector<8x1xf32> to vector<8x32xf32>
    %24 = arith.subf %7, %23 : vector<8x32xf32>
    %25 = vector.broadcast %22 : vector<8x1xf32> to vector<8x32xf32>
    %26 = arith.mulf %24, %25 : vector<8x32xf32>
    %27 = vector.broadcast %0 : vector<1x32xf32> to vector<8x32xf32>
    %28 = arith.mulf %26, %27 : vector<8x32xf32>
    %29 = vector.broadcast %1 : vector<1x32xf32> to vector<8x32xf32>
    %30 = arith.addf %28, %29 : vector<8x32xf32>
    %c0_13 = arith.constant 0 : index
    %c0_14 = arith.constant 0 : index
    %31 = vector.load %arg3[%c0_13, %c0_14] : memref<32x96xf32, #tpu.memory_space<vmem>>, vector<32x96xf32>
    %cst_15 = arith.constant dense<0.000000e+00> : vector<8x96xf32>
    %32 = tpu.matmul %30, %31, %cst_15 {dimension_numbers = #tpu.dot_dimension_numbers<[1], [0], [0], [1], [0, 0, 1, 1], [], []>} : vector<8x32xf32>, vector<32x96xf32>, vector<8x96xf32> -> vector<8x96xf32>
    %c0_16 = arith.constant 0 : index
    %c0_17 = arith.constant 0 : index
    %33 = vector.load %arg4[%c0_16, %c0_17] : memref<1x96xf32, #tpu.memory_space<vmem>>, vector<1x96xf32>
    %34 = vector.broadcast %33 : vector<1x96xf32> to vector<8x96xf32>
    %35 = arith.addf %32, %34 : vector<8x96xf32>
    %36 = vector.extract_strided_slice %35 {offsets = [0, 0], sizes = [8, 8], strides = [1, 1]} : vector<8x96xf32> to vector<8x8xf32>
    %37 = vector.extract_strided_slice %35 {offsets = [0, 8], sizes = [8, 8], strides = [1, 1]} : vector<8x96xf32> to vector<8x8xf32>
    %38 = vector.extract_strided_slice %35 {offsets = [0, 16], sizes = [8, 8], strides = [1, 1]} : vector<8x96xf32> to vector<8x8xf32>
    %39 = vector.extract_strided_slice %35 {offsets = [0, 24], sizes = [8, 8], strides = [1, 1]} : vector<8x96xf32> to vector<8x8xf32>
    %40 = vector.extract_strided_slice %35 {offsets = [0, 32], sizes = [8, 8], strides = [1, 1]} : vector<8x96xf32> to vector<8x8xf32>
    %41 = vector.extract_strided_slice %35 {offsets = [0, 40], sizes = [8, 8], strides = [1, 1]} : vector<8x96xf32> to vector<8x8xf32>
    %42 = vector.extract_strided_slice %35 {offsets = [0, 48], sizes = [8, 8], strides = [1, 1]} : vector<8x96xf32> to vector<8x8xf32>
    %43 = vector.extract_strided_slice %35 {offsets = [0, 56], sizes = [8, 8], strides = [1, 1]} : vector<8x96xf32> to vector<8x8xf32>
    %44 = vector.extract_strided_slice %35 {offsets = [0, 64], sizes = [8, 8], strides = [1, 1]} : vector<8x96xf32> to vector<8x8xf32>
    %45 = vector.extract_strided_slice %35 {offsets = [0, 72], sizes = [8, 8], strides = [1, 1]} : vector<8x96xf32> to vector<8x8xf32>
    %46 = vector.extract_strided_slice %35 {offsets = [0, 80], sizes = [8, 8], strides = [1, 1]} : vector<8x96xf32> to vector<8x8xf32>
    %47 = vector.extract_strided_slice %35 {offsets = [0, 88], sizes = [8, 8], strides = [1, 1]} : vector<8x96xf32> to vector<8x8xf32>
    %48 = tpu.concatenate %36, %37, %38, %39 in 0 : vector<8x8xf32>, vector<8x8xf32>, vector<8x8xf32>, vector<8x8xf32> -> vector<32x8xf32>
    %49 = vector.shape_cast %48 : vector<32x8xf32> to vector<4x8x8xf32>
    %50 = tpu.concatenate %40, %41, %42, %43 in 0 : vector<8x8xf32>, vector<8x8xf32>, vector<8x8xf32>, vector<8x8xf32> -> vector<32x8xf32>
    %51 = vector.shape_cast %50 : vector<32x8xf32> to vector<4x8x8xf32>
    %52 = tpu.concatenate %44, %45, %46, %47 in 0 : vector<8x8xf32>, vector<8x8xf32>, vector<8x8xf32>, vector<8x8xf32> -> vector<32x8xf32>
    %53 = vector.shape_cast %52 : vector<32x8xf32> to vector<4x8x8xf32>
    "tpu.trace_start"() <{level = 10 : i32, message = "bqd,bkd->bqk"}> : () -> ()
    %cst_18 = arith.constant dense<0.000000e+00> : vector<4x8x8xf32>
    %54 = tpu.matmul %49, %51, %cst_18 {dimension_numbers = #tpu.dot_dimension_numbers<[2], [2], [1], [1], [0, 0, 0, 1, 1, 1], [0], [0]>} : vector<4x8x8xf32>, vector<4x8x8xf32>, vector<4x8x8xf32> -> vector<4x8x8xf32>
    "tpu.trace_stop"() : () -> ()
    %55 = tpu.iota {dimensions = array<i32: 0>} : vector<8x8xi32>
    %56 = tpu.iota {dimensions = array<i32: 1>} : vector<8x8xi32>
    %57 = arith.cmpi sle, %56, %55 : vector<8x8xi32>
    %cst_19 = arith.constant 0.000000e+00 : f32
    %cst_20 = arith.constant -1.000000e+05 : f32
    %58 = vector.broadcast %cst_19 : f32 to vector<8x8xf32>
    %59 = vector.broadcast %cst_20 : f32 to vector<8x8xf32>
    %60 = arith.select %57, %58, %59 : vector<8x8xi1>, vector<8x8xf32>
    %61 = vector.shape_cast %60 : vector<8x8xf32> to vector<1x8x8xf32>
    %62 = vector.broadcast %61 : vector<1x8x8xf32> to vector<4x8x8xf32>
    %63 = arith.addf %54, %62 : vector<4x8x8xf32>
    %cst_21 = arith.constant dense<0xFF800000> : vector<4x8xf32>
    %64 = vector.multi_reduction <maximumf>, %63, %cst_21 [2] : vector<4x8x8xf32> to vector<4x8xf32>
    %65 = vector.shape_cast %64 : vector<4x8xf32> to vector<4x8x1xf32>
    %66 = vector.broadcast %65 : vector<4x8x1xf32> to vector<4x8x8xf32>
    %67 = arith.subf %63, %66 : vector<4x8x8xf32>
    %68 = math.exp %67 : vector<4x8x8xf32>
    %cst_22 = arith.constant dense<0.000000e+00> : vector<4x8xf32>
    %69 = vector.multi_reduction <add>, %68, %cst_22 [2] : vector<4x8x8xf32> to vector<4x8xf32>
    %70 = vector.shape_cast %69 : vector<4x8xf32> to vector<4x8x1xf32>
    %71 = tpu.reciprocal %70 : vector<4x8x1xf32> -> vector<4x8x1xf32>
    %72 = vector.broadcast %71 : vector<4x8x1xf32> to vector<4x8x8xf32>
    %73 = arith.mulf %68, %72 : vector<4x8x8xf32>
    "tpu.trace_start"() <{level = 10 : i32, message = "bqk,bkd->bqd"}> : () -> ()
    %cst_23 = arith.constant dense<0.000000e+00> : vector<4x8x8xf32>
    %74 = tpu.matmul %73, %53, %cst_23 {dimension_numbers = #tpu.dot_dimension_numbers<[2], [1], [1], [2], [0, 0, 0, 1, 1, 2], [0], [0]>} : vector<4x8x8xf32>, vector<4x8x8xf32>, vector<4x8x8xf32> -> vector<4x8x8xf32>
    "tpu.trace_stop"() : () -> ()
    %75 = vector.shape_cast %74 : vector<4x8x8xf32> to vector<32x8xf32>
    %76 = vector.extract_strided_slice %75 {offsets = [0, 0], sizes = [8, 8], strides = [1, 1]} : vector<32x8xf32> to vector<8x8xf32>
    %77 = vector.extract_strided_slice %75 {offsets = [8, 0], sizes = [8, 8], strides = [1, 1]} : vector<32x8xf32> to vector<8x8xf32>
    %78 = vector.extract_strided_slice %75 {offsets = [16, 0], sizes = [8, 8], strides = [1, 1]} : vector<32x8xf32> to vector<8x8xf32>
    %79 = vector.extract_strided_slice %75 {offsets = [24, 0], sizes = [8, 8], strides = [1, 1]} : vector<32x8xf32> to vector<8x8xf32>
    %80 = tpu.concatenate %76, %77, %78, %79 in 1 : vector<8x8xf32>, vector<8x8xf32>, vector<8x8xf32>, vector<8x8xf32> -> vector<8x32xf32>
    %c0_24 = arith.constant 0 : index
    %c0_25 = arith.constant 0 : index
    %81 = vector.load %arg5[%c0_24, %c0_25] : memref<32x32xf32, #tpu.memory_space<vmem>>, vector<32x32xf32>
    %cst_26 = arith.constant dense<0.000000e+00> : vector<8x32xf32>
    %82 = tpu.matmul %80, %81, %cst_26 {dimension_numbers = #tpu.dot_dimension_numbers<[1], [0], [0], [1], [0, 0, 1, 1], [], []>} : vector<8x32xf32>, vector<32x32xf32>, vector<8x32xf32> -> vector<8x32xf32>
    %83 = vector.broadcast %4 : vector<1x32xf32> to vector<8x32xf32>
    %84 = arith.addf %82, %83 : vector<8x32xf32>
    %85 = arith.addf %7, %84 : vector<8x32xf32>
    %cst_27 = arith.constant dense<0.000000e+00> : vector<8xf32>
    %86 = vector.multi_reduction <add>, %85, %cst_27 [1] : vector<8x32xf32> to vector<8xf32>
    %87 = vector.shape_cast %86 : vector<8xf32> to vector<8x1xf32>
    %cst_28 = arith.constant 3.200000e+01 : f32
    %88 = vector.broadcast %cst_28 : f32 to vector<8x1xf32>
    %89 = arith.divf %87, %88 : vector<8x1xf32>
    %90 = vector.broadcast %89 : vector<8x1xf32> to vector<8x32xf32>
    %91 = arith.subf %85, %90 : vector<8x32xf32>
    %92 = arith.mulf %91, %91 : vector<8x32xf32>
    %cst_29 = arith.constant dense<0.000000e+00> : vector<8xf32>
    %93 = vector.multi_reduction <add>, %92, %cst_29 [1] : vector<8x32xf32> to vector<8xf32>
    %94 = vector.shape_cast %93 : vector<8xf32> to vector<8x1xf32>
    %cst_30 = arith.constant 0.0322580636 : f32
    %95 = vector.broadcast %cst_30 : f32 to vector<8x1xf32>
    %96 = arith.mulf %94, %95 : vector<8x1xf32>
    %97 = math.sqrt %96 : vector<8x1xf32>
    %cst_31 = arith.constant 9.99999974E-6 : f32
    %98 = vector.broadcast %cst_31 : f32 to vector<8x1xf32>
    %99 = arith.addf %97, %98 : vector<8x1xf32>
    %100 = tpu.reciprocal %99 : vector<8x1xf32> -> vector<8x1xf32>
    %101 = vector.broadcast %89 : vector<8x1xf32> to vector<8x32xf32>
    %102 = arith.subf %85, %101 : vector<8x32xf32>
    %103 = vector.broadcast %100 : vector<8x1xf32> to vector<8x32xf32>
    %104 = arith.mulf %102, %103 : vector<8x32xf32>
    %105 = vector.broadcast %2 : vector<1x32xf32> to vector<8x32xf32>
    %106 = arith.mulf %104, %105 : vector<8x32xf32>
    %107 = vector.broadcast %3 : vector<1x32xf32> to vector<8x32xf32>
    %108 = arith.addf %106, %107 : vector<8x32xf32>
    %c0_32 = arith.constant 0 : index
    %c0_33 = arith.constant 0 : index
    %109 = vector.load %arg6[%c0_32, %c0_33] : memref<32x128xf32, #tpu.memory_space<vmem>>, vector<32x128xf32>
    %cst_34 = arith.constant dense<0.000000e+00> : vector<8x128xf32>
    %110 = tpu.matmul %108, %109, %cst_34 {dimension_numbers = #tpu.dot_dimension_numbers<[1], [0], [0], [1], [0, 0, 1, 1], [], []>} : vector<8x32xf32>, vector<32x128xf32>, vector<8x128xf32> -> vector<8x128xf32>
    %c0_35 = arith.constant 0 : index
    %c0_36 = arith.constant 0 : index
    %111 = vector.load %arg7[%c0_35, %c0_36] : memref<1x128xf32, #tpu.memory_space<vmem>>, vector<1x128xf32>
    %112 = vector.broadcast %111 : vector<1x128xf32> to vector<8x128xf32>
    %113 = arith.addf %110, %112 : vector<8x128xf32>
    %cst_37 = arith.constant 5.000000e-01 : f32
    %114 = vector.broadcast %cst_37 : f32 to vector<8x128xf32>
    %115 = arith.mulf %114, %113 : vector<8x128xf32>
    %cst_38 = arith.constant 0.707106769 : f32
    %116 = vector.broadcast %cst_38 : f32 to vector<8x128xf32>
    %117 = arith.mulf %113, %116 : vector<8x128xf32>
    %cst_39 = arith.constant 0.000000e+00 : f32
    %118 = vector.broadcast %cst_39 : f32 to vector<8x128xf32>
    %119 = arith.cmpf oge, %117, %118 : vector<8x128xf32>
    %cst_40 = arith.constant 1.000000e+00 : f32
    %cst_41 = arith.constant -1.000000e+00 : f32
    %120 = vector.broadcast %cst_40 : f32 to vector<8x128xf32>
    %121 = vector.broadcast %cst_41 : f32 to vector<8x128xf32>
    %122 = arith.select %119, %120, %121 : vector<8x128xi1>, vector<8x128xf32>
    %123 = math.absf %117 : vector<8x128xf32>
    %cst_42 = arith.constant 0.327591091 : f32
    %124 = vector.broadcast %cst_42 : f32 to vector<8x128xf32>
    %125 = arith.mulf %124, %123 : vector<8x128xf32>
    %cst_43 = arith.constant 1.000000e+00 : f32
    %126 = vector.broadcast %cst_43 : f32 to vector<8x128xf32>
    %127 = arith.addf %126, %125 : vector<8x128xf32>
    %128 = tpu.reciprocal %127 {approx = true} : vector<8x128xf32> -> vector<8x128xf32>
    %cst_44 = arith.constant 1.06140542 : f32
    %129 = vector.broadcast %cst_44 : f32 to vector<8x128xf32>
    %130 = arith.mulf %128, %129 : vector<8x128xf32>
    %cst_45 = arith.constant -1.45315206 : f32
    %131 = vector.broadcast %cst_45 : f32 to vector<8x128xf32>
    %132 = arith.addf %131, %130 : vector<8x128xf32>
    %133 = arith.mulf %128, %132 : vector<8x128xf32>
    %cst_46 = arith.constant 1.42141378 : f32
    %134 = vector.broadcast %cst_46 : f32 to vector<8x128xf32>
    %135 = arith.addf %134, %133 : vector<8x128xf32>
    %136 = arith.mulf %128, %135 : vector<8x128xf32>
    %cst_47 = arith.constant -0.284496725 : f32
    %137 = vector.broadcast %cst_47 : f32 to vector<8x128xf32>
    %138 = arith.addf %137, %136 : vector<8x128xf32>
    %139 = arith.mulf %128, %138 : vector<8x128xf32>
    %cst_48 = arith.constant 0.254829586 : f32
    %140 = vector.broadcast %cst_48 : f32 to vector<8x128xf32>
    %141 = arith.addf %140, %139 : vector<8x128xf32>
    %142 = arith.mulf %128, %141 : vector<8x128xf32>
    %cst_49 = arith.constant 0.000000e+00 : f32
    %143 = vector.broadcast %cst_49 : f32 to vector<8x128xf32>
    %144 = arith.subf %143, %123 : vector<8x128xf32>
    %145 = arith.mulf %144, %123 : vector<8x128xf32>
    %146 = math.exp %145 : vector<8x128xf32>
    %147 = arith.mulf %142, %146 : vector<8x128xf32>
    %cst_50 = arith.constant 1.000000e+00 : f32
    %148 = vector.broadcast %cst_50 : f32 to vector<8x128xf32>
    %149 = arith.subf %148, %147 : vector<8x128xf32>
    %150 = arith.mulf %122, %149 : vector<8x128xf32>
    %cst_51 = arith.constant 1.000000e+00 : f32
    %151 = vector.broadcast %cst_51 : f32 to vector<8x128xf32>
    %152 = arith.addf %151, %150 : vector<8x128xf32>
    %153 = arith.mulf %115, %152 : vector<8x128xf32>
    %c0_52 = arith.constant 0 : index
    %c0_53 = arith.constant 0 : index
    %154 = vector.load %arg8[%c0_52, %c0_53] : memref<128x32xf32, #tpu.memory_space<vmem>>, vector<128x32xf32>
    %cst_54 = arith.constant dense<0.000000e+00> : vector<8x32xf32>
    %155 = tpu.matmul %153, %154, %cst_54 {dimension_numbers = #tpu.dot_dimension_numbers<[1], [0], [0], [1], [0, 0, 1, 1], [], []>} : vector<8x128xf32>, vector<128x32xf32>, vector<8x32xf32> -> vector<8x32xf32>
    %156 = vector.broadcast %5 : vector<1x32xf32> to vector<8x32xf32>
    %157 = arith.addf %155, %156 : vector<8x32xf32>
    %158 = arith.addf %157, %85 : vector<8x32xf32>
    %159 = vector.shape_cast %158 : vector<8x32xf32> to vector<1x8x32xf32>
    %c0_55 = arith.constant 0 : index
    %c0_56 = arith.constant 0 : index
    %c0_57 = arith.constant 0 : index
    %160 = vector.load %arg9[%c0_55, %c0_56, %c0_57] : memref<1x8x32xf32, #tpu.memory_space<vmem>>, vector<1x8x32xf32>
    tpu.vector_store %arg9[%c0_55, %c0_56, %c0_57], %159 {strides = array<i32>} : memref<1x8x32xf32, #tpu.memory_space<vmem>>, vector<1x8x32xf32>,
    return
  }
  func.func @transform_0(%arg0: i32) -> (i32, i32, i32) {
    %c0_i32 = arith.constant 0 : i32
    %c0_i32_0 = arith.constant 0 : i32
    %c0_i32_1 = arith.constant 0 : i32
    return %arg0, %c0_i32, %c0_i32_0 : i32, i32, i32
  }
  func.func @transform_1(%arg0: i32) -> (i32, i32) {
    %c0_i32 = arith.constant 0 : i32
    %c0_i32_0 = arith.constant 0 : i32
    %c0_i32_1 = arith.constant 0 : i32
    return %c0_i32, %c0_i32_0 : i32, i32
  }
  func.func @transform_2(%arg0: i32) -> (i32, i32) {
    %c0_i32 = arith.constant 0 : i32
    %c0_i32_0 = arith.constant 0 : i32
    %c0_i32_1 = arith.constant 0 : i32
    return %c0_i32, %c0_i32_0 : i32, i32
  }
  func.func @transform_3(%arg0: i32) -> (i32, i32) {
    %c0_i32 = arith.constant 0 : i32
    %c0_i32_0 = arith.constant 0 : i32
    %c0_i32_1 = arith.constant 0 : i32
    return %c0_i32, %c0_i32_0 : i32, i32
  }
  func.func @transform_4(%arg0: i32) -> (i32, i32) {
    %c0_i32 = arith.constant 0 : i32
    %c0_i32_0 = arith.constant 0 : i32
    %c0_i32_1 = arith.constant 0 : i32
    return %c0_i32, %c0_i32_0 : i32, i32
  }
  func.func @transform_5(%arg0: i32) -> (i32, i32) {
    %c0_i32 = arith.constant 0 : i32
    %c0_i32_0 = arith.constant 0 : i32
    %c0_i32_1 = arith.constant 0 : i32
    return %c0_i32, %c0_i32_0 : i32, i32
  }
  func.func @transform_6(%arg0: i32) -> (i32, i32) {
    %c0_i32 = arith.constant 0 : i32
    %c0_i32_0 = arith.constant 0 : i32
    %c0_i32_1 = arith.constant 0 : i32
    return %c0_i32, %c0_i32_0 : i32, i32
  }
  func.func @transform_7(%arg0: i32) -> (i32, i32) {
    %c0_i32 = arith.constant 0 : i32
    %c0_i32_0 = arith.constant 0 : i32
    %c0_i32_1 = arith.constant 0 : i32
    return %c0_i32, %c0_i32_0 : i32, i32
  }
  func.func @transform_8(%arg0: i32) -> (i32, i32, i32) {
    %c0_i32 = arith.constant 0 : i32
    %c0_i32_0 = arith.constant 0 : i32
    %c0_i32_1 = arith.constant 0 : i32
    return %arg0, %c0_i32, %c0_i32_0 : i32, i32, i32
  }
}

</mosaic_0001>

<llo_original>
// kernel: transformer_block.1
$region0: #{transformer_block.1}
  #allocation0 [shape = 'u32[]', space=smem, size = 0x4, offset = 0x4, fixed_abs, tag = 'smem constant byte address 0x4 - core index']
  #allocation1 [shape = 'u32[144,128]{1,0:T(1,128)}', space=vmem, size = 0x12000, scoped, tag = 'internal scratch']
  %s0 = inlined_call_operand.vmem [shape: f32[2,8,32], index: 0, kind: input, shape index: {}]
  %s1 = inlined_call_operand.vmem [shape: f32[8,32], index: 1, kind: input, shape index: {}]
  %s2 = inlined_call_operand.vmem [shape: f32[32,96], index: 2, kind: input, shape index: {}]
  %s3 = inlined_call_operand.vmem [shape: f32[1,96], index: 3, kind: input, shape index: {}]
  %s4 = inlined_call_operand.vmem [shape: f32[32,32], index: 4, kind: input, shape index: {}]
  %s5 = inlined_call_operand.vmem [shape: f32[32,128], index: 5, kind: input, shape index: {}]
  %s6 = inlined_call_operand.vmem [shape: f32[1,128], index: 6, kind: input, shape index: {}]
  %s7 = inlined_call_operand.vmem [shape: f32[128,32], index: 7, kind: input, shape index: {}]
  %s8 = inlined_call_operand.hbm [shape: f32[2,8,32], index: 8, kind: output, shape index: {}]
  %s9 = sld [smem:[#allocation0]]
  $region65: #{transformer_block.1} parent=0
    _
  %s11 = ssub.s32 1, %s9
  %s12 = scalar_select 0, %s11, %s9
  $region1: #{transformer_block.1} parent=0
    #allocation2 [shape = 'u8[8192]{0}', space=vmem, size = 0x2000, scoped, tag = 'output window, operand 0']
    #allocation3 [shape = 's32[2]{0}', space=sflag, size = 0x8, scoped, tag = 'scoped memory for transformer_block.1']
    %13 = vsyncpa [#allocation3], 0
    %s14 = scalar_lea.sflag [#allocation3], 1
    %15 = vsyncpa %s14, 0
    loop: start=0, step=1, limit=4
    $region2: #{transformer_block.1} parent=1 // loop_pre_header
      _
    $region3: #{transformer_block.1} parent=1 // loop_header
      %s17 = sphi 0, %s21
      %p18 = scmp.ge.s32.totalorder %s17, 4
      %s27 = sphi 0, %s29
      %s30 = sphi 0, %s27
      %s31 = sphi 0, %s30
      %s47 = sphi 0, %s31
      %s51 = sphi 0, %s51
      %s53 = sphi 0, %s51
      %s54 = sphi 0, %s53
      %s68 = sphi 0, %s54
      %s72 = sphi 0, %s72
      %s74 = sphi 0, %s72
      %s75 = sphi 0, %s74
      %s89 = sphi 0, %s75
      %s93 = sphi 0, %s93
      %s95 = sphi 0, %s93
      %s96 = sphi 0, %s95
      %s110 = sphi 0, %s96
      %s114 = sphi 0, %s114
      %s116 = sphi 0, %s114
      %s117 = sphi 0, %s116
      %s131 = sphi 0, %s117
      %s135 = sphi 0, %s135
      %s137 = sphi 0, %s135
      %s138 = sphi 0, %s137
      %s152 = sphi 0, %s138
      %s156 = sphi 0, %s156
      %s158 = sphi 0, %s156
      %s159 = sphi 0, %s158
      %s173 = sphi 0, %s159
      %s177 = sphi 0, %s177
      %s179 = sphi 0, %s177
      %s180 = sphi 0, %s179
      %s194 = sphi 0, %s180
      %s200 = sphi 0, %s202
      %s203 = sphi 0, %s200
      %s204 = sphi 0, %s203
      %s220 = sphi 0, %s204
    $region4: #{transformer_block.1} parent=1 // loop_header_branch
      %20 = sbr.rel (%p18) target = $region8
    $region5: #{transformer_block.1} parent=1 // loop_body
      %s22 = ssub.s32 %s17, 1
      %s23 = ssub.s32 %s17, 2
      %s24 = sadd.s32 %s17, 1
      %s25 = ssub.s32 %s17, %s24
      %p26 = scmp.eq.s32.totalorder %s25, 0
      %s28 = sadd.s32 %s27, 1
      %s29 = scalar_select %p26, %s27, %s28
      %p32 = pneg %p26
      %p33 = scmp.eq.s32.totalorder %s17, 1
      %p34 = por %p32, %p33
      %p35 = scmp.ne.s32.totalorder %s27, %s30
      %p36 = scmp.eq.s32.totalorder %s17, 0
      %p37 = por %p35, %p36
      %p38 = scmp.ne.s32.totalorder %s27, %s30
      %p39 = scmp.eq.s32.totalorder %s22, 1
      %p40 = por %p38, %p39
      %p41 = scmp.ne.s32.totalorder %s30, %s31
      %p42 = scmp.eq.s32.totalorder %s22, 0
      %p43 = por %p41, %p42
      %p44 = scmp.ne.s32.totalorder %s30, %s31
      %p45 = scmp.eq.s32.totalorder %s23, 1
      %p46 = por %p44, %p45
      %p48 = scmp.ne.s32.totalorder %s31, %s47
      %p49 = scmp.eq.s32.totalorder %s23, 0
      %p50 = por %p48, %p49
      %s52 = sadd.s32 %s51, 1
      %p55 = scmp.eq.s32.totalorder %s17, 1
      %p56 = scmp.ne.s32.totalorder %s51, %s53
      %p57 = scmp.eq.s32.totalorder %s17, 0
      %p58 = por %p56, %p57
      %p59 = scmp.ne.s32.totalorder %s51, %s53
      %p60 = scmp.eq.s32.totalorder %s22, 1
      %p61 = por %p59, %p60
      %p62 = scmp.ne.s32.totalorder %s53, %s54
      %p63 = scmp.eq.s32.totalorder %s22, 0
      %p64 = por %p62, %p63
      %p65 = scmp.ne.s32.totalorder %s53, %s54
      %p66 = scmp.eq.s32.totalorder %s23, 1
      %p67 = por %p65, %p66
      %p69 = scmp.ne.s32.totalorder %s54, %s68
      %p70 = scmp.eq.s32.totalorder %s23, 0
      %p71 = por %p69, %p70
      %s73 = sadd.s32 %s72, 1
      %p76 = scmp.eq.s32.totalorder %s17, 1
      %p77 = scmp.ne.s32.totalorder %s72, %s74
      %p78 = scmp.eq.s32.totalorder %s17, 0
      %p79 = por %p77, %p78
      %p80 = scmp.ne.s32.totalorder %s72, %s74
      %p81 = scmp.eq.s32.totalorder %s22, 1
      %p82 = por %p80, %p81
      %p83 = scmp.ne.s32.totalorder %s74, %s75
      %p84 = scmp.eq.s32.totalorder %s22, 0
      %p85 = por %p83, %p84
      %p86 = scmp.ne.s32.totalorder %s74, %s75
      %p87 = scmp.eq.s32.totalorder %s23, 1
      %p88 = por %p86, %p87
      %p90 = scmp.ne.s32.totalorder %s75, %s89
      %p91 = scmp.eq.s32.totalorder %s23, 0
      %p92 = por %p90, %p91
      %s94 = sadd.s32 %s93, 1
      %p97 = scmp.eq.s32.totalorder %s17, 1
      %p98 = scmp.ne.s32.totalorder %s93, %s95
      %p99 = scmp.eq.s32.totalorder %s17, 0
      %p100 = por %p98, %p99
      %p101 = scmp.ne.s32.totalorder %s93, %s95
      %p102 = scmp.eq.s32.totalorder %s22, 1
      %p103 = por %p101, %p102
      %p104 = scmp.ne.s32.totalorder %s95, %s96
      %p105 = scmp.eq.s32.totalorder %s22, 0
      %p106 = por %p104, %p105
      %p107 = scmp.ne.s32.totalorder %s95, %s96
      %p108 = scmp.eq.s32.totalorder %s23, 1
      %p109 = por %p107, %p108
      %p111 = scmp.ne.s32.totalorder %s96, %s110
      %p112 = scmp.eq.s32.totalorder %s23, 0
      %p113 = por %p111, %p112
      %s115 = sadd.s32 %s114, 1
      %p118 = scmp.eq.s32.totalorder %s17, 1
      %p119 = scmp.ne.s32.totalorder %s114, %s116
      %p120 = scmp.eq.s32.totalorder %s17, 0
      %p121 = por %p119, %p120
      %p122 = scmp.ne.s32.totalorder %s114, %s116
      %p123 = scmp.eq.s32.totalorder %s22, 1
      %p124 = por %p122, %p123
      %p125 = scmp.ne.s32.totalorder %s116, %s117
      %p126 = scmp.eq.s32.totalorder %s22, 0
      %p127 = por %p125, %p126
      %p128 = scmp.ne.s32.totalorder %s116, %s117
      %p129 = scmp.eq.s32.totalorder %s23, 1
      %p130 = por %p128, %p129
      %p132 = scmp.ne.s32.totalorder %s117, %s131
      %p133 = scmp.eq.s32.totalorder %s23, 0
      %p134 = por %p132, %p133
      %s136 = sadd.s32 %s135, 1
      %p139 = scmp.eq.s32.totalorder %s17, 1
      %p140 = scmp.ne.s32.totalorder %s135, %s137
      %p141 = scmp.eq.s32.totalorder %s17, 0
      %p142 = por %p140, %p141
      %p143 = scmp.ne.s32.totalorder %s135, %s137
      %p144 = scmp.eq.s32.totalorder %s22, 1
      %p145 = por %p143, %p144
      %p146 = scmp.ne.s32.totalorder %s137, %s138
      %p147 = scmp.eq.s32.totalorder %s22, 0
      %p148 = por %p146, %p147
      %p149 = scmp.ne.s32.totalorder %s137, %s138
      %p150 = scmp.eq.s32.totalorder %s23, 1
      %p151 = por %p149, %p150
      %p153 = scmp.ne.s32.totalorder %s138, %s152
      %p154 = scmp.eq.s32.totalorder %s23, 0
      %p155 = por %p153, %p154
      %s157 = sadd.s32 %s156, 1
      %p160 = scmp.eq.s32.totalorder %s17, 1
      %p161 = scmp.ne.s32.totalorder %s156, %s158
      %p162 = scmp.eq.s32.totalorder %s17, 0
      %p163 = por %p161, %p162
      %p164 = scmp.ne.s32.totalorder %s156, %s158
      %p165 = scmp.eq.s32.totalorder %s22, 1
      %p166 = por %p164, %p165
      %p167 = scmp.ne.s32.totalorder %s158, %s159
      %p168 = scmp.eq.s32.totalorder %s22, 0
      %p169 = por %p167, %p168
      %p170 = scmp.ne.s32.totalorder %s158, %s159
      %p171 = scmp.eq.s32.totalorder %s23, 1
      %p172 = por %p170, %p171
      %p174 = scmp.ne.s32.totalorder %s159, %s173
      %p175 = scmp.eq.s32.totalorder %s23, 0
      %p176 = por %p174, %p175
      %s178 = sadd.s32 %s177, 1
      %p181 = scmp.eq.s32.totalorder %s17, 1
      %p182 = scmp.ne.s32.totalorder %s177, %s179
      %p183 = scmp.eq.s32.totalorder %s17, 0
      %p184 = por %p182, %p183
      %p185 = scmp.ne.s32.totalorder %s177, %s179
      %p186 = scmp.eq.s32.totalorder %s22, 1
      %p187 = por %p185, %p186
      %p188 = scmp.ne.s32.totalorder %s179, %s180
      %p189 = scmp.eq.s32.totalorder %s22, 0
      %p190 = por %p188, %p189
      %p191 = scmp.ne.s32.totalorder %s179, %s180
      %p192 = scmp.eq.s32.totalorder %s23, 1
      %p193 = por %p191, %p192
      %p195 = scmp.ne.s32.totalorder %s180, %s194
      %p196 = scmp.eq.s32.totalorder %s23, 0
      %p197 = por %p195, %p196
      %s198 = ssub.s32 %s17, %s24
      %p199 = scmp.eq.s32.totalorder %s198, 0
      %s201 = sadd.s32 %s200, 1
      %s202 = scalar_select %p199, %s200, %s201
      %p205 = pneg %p199
      %p206 = scmp.eq.s32.totalorder %s17, 1
      %p207 = por %p205, %p206
      %p208 = scmp.ne.s32.totalorder %s200, %s203
      %p209 = scmp.eq.s32.totalorder %s17, 0
      %p210 = por %p208, %p209
      %p211 = scmp.ne.s32.totalorder %s200, %s203
      %p212 = scmp.eq.s32.totalorder %s22, 1
      %p213 = por %p211, %p212
      %p214 = scmp.ne.s32.totalorder %s203, %s204
      %p215 = scmp.eq.s32.totalorder %s22, 0
      %p216 = por %p214, %p215
      %p217 = scmp.ne.s32.totalorder %s203, %s204
      %p218 = scmp.eq.s32.totalorder %s23, 1
      %p219 = por %p217, %p218
      %p221 = scmp.ne.s32.totalorder %s204, %s220
      %p222 = scmp.eq.s32.totalorder %s23, 0
      %p223 = por %p221, %p222
      %p224 = scmp.le.s32.totalorder 1, %s17
      %p225 = scmp.lt.s32.totalorder %s17, 3
      %p226 = pnand %p224, %p225
      %p227 = pneg %p226
      // Predicated region
      $region9: #{transformer_block.1} parent=5 // pred_check
        _
      $region10: #{transformer_block.1} parent=5 // pred_check_branch
        %229 = sbr.rel (%p226) target = $region12
      $region11: #{transformer_block.1} parent=5 // pred_region
        %s230 = ssub.s32 %s17, 1
        // Predicated region
        $region13: #{transformer_block.1} parent=11 // pred_check
          %p231 = pneg %p64
        $region14: #{transformer_block.1} parent=11 // pred_check_branch
          %233 = sbr.rel (%p231) target = $region16
        $region15: #{transformer_block.1} parent=11 // pred_region
          _
        $region16: #{transformer_block.1} parent=11 // pred_fallthru
          _
        // Predicated region
        $region17: #{transformer_block.1} parent=11 // pred_check
          %p234 = pneg %p85
        $region18: #{transformer_block.1} parent=11 // pred_check_branch
          %236 = sbr.rel (%p234) target = $region20
        $region19: #{transformer_block.1} parent=11 // pred_region
          _
        $region20: #{transformer_block.1} parent=11 // pred_fallthru
          _
        // Predicated region
        $region21: #{transformer_block.1} parent=11 // pred_check
          %p237 = pneg %p106
        $region22: #{transformer_block.1} parent=11 // pred_check_branch
          %239 = sbr.rel (%p237) target = $region24
        $region23: #{transformer_block.1} parent=11 // pred_region
          _
        $region24: #{transformer_block.1} parent=11 // pred_fallthru
          _
        // Predicated region
        $region25: #{transformer_block.1} parent=11 // pred_check
          %p240 = pneg %p127
        $region26: #{transformer_block.1} parent=11 // pred_check_branch
          %242 = sbr.rel (%p240) target = $region28
        $region27: #{transformer_block.1} parent=11 // pred_region
          _
        $region28: #{transformer_block.1} parent=11 // pred_fallthru
          _
        // Predicated region
        $region29: #{transformer_block.1} parent=11 // pred_check
          %p243 = pneg %p148
        $region30: #{transformer_block.1} parent=11 // pred_check_branch
          %245 = sbr.rel (%p243) target = $region32
        $region31: #{transformer_block.1} parent=11 // pred_region
          _
        $region32: #{transformer_block.1} parent=11 // pred_fallthru
          _
        // Predicated region
        $region33: #{transformer_block.1} parent=11 // pred_check
          %p246 = pneg %p169
        $region34: #{transformer_block.1} parent=11 // pred_check_branch
          %248 = sbr.rel (%p246) target = $region36
        $region35: #{transformer_block.1} parent=11 // pred_region
          _
        $region36: #{transformer_block.1} parent=11 // pred_fallthru
          _
        // Predicated region
        $region37: #{transformer_block.1} parent=11 // pred_check
          %p249 = pneg %p190
        $region38: #{transformer_block.1} parent=11 // pred_check_branch
          %251 = sbr.rel (%p249) target = $region40
        $region39: #{transformer_block.1} parent=11 // pred_region
          _
        $region40: #{transformer_block.1} parent=11 // pred_fallthru
          _
      $region12: #{transformer_block.1} parent=5 // pred_fallthru
        _
      %p252 = scmp.lt.s32.totalorder %s17, 2
      // Predicated region
      $region41: #{transformer_block.1} parent=5 // pred_check
        %p253 = pneg %p252
      $region42: #{transformer_block.1} parent=5 // pred_check_branch
        %255 = sbr.rel (%p253) target = $region44
      $region43: #{transformer_block.1} parent=5 // pred_region
        // Predicated region
        $region45: #{transformer_block.1} parent=43 // pred_check
          %p256 = pneg %p37
        $region46: #{transformer_block.1} parent=43 // pred_check_branch
          %258 = sbr.rel (%p256) target = $region48
        $region47: #{transformer_block.1} parent=43 // pred_region
          %p259 = scmp.lt.s32.totalorder %s17, 1
          %s260 = scalar_select %p259, %s17, 1
          %s261 = smul.addr %s260, 8
          %s262 = scalar_lea.vmem %s0, %s261
        $region48: #{transformer_block.1} parent=43 // pred_fallthru
          _
      $region44: #{transformer_block.1} parent=5 // pred_fallthru
        _
      %p263 = scmp.le.s32.totalorder 1, %s17
      %p264 = scmp.lt.s32.totalorder %s17, 3
      %p265 = pnand %p263, %p264
      %p266 = pneg %p265
      // Predicated region
      $region49: #{transformer_block.1} parent=5 // pred_check
        _
      $region50: #{transformer_block.1} parent=5 // pred_check_branch
        %268 = sbr.rel (%p265) target = $region52
      $region51: #{transformer_block.1} parent=5 // pred_region
        %s269 = ssub.s32 %s17, 1
        %p270 = scmp.lt.s32.totalorder %s22, 1
        %s271 = scalar_select %p270, %s22, 1
        %s272 = smul.addr %s271, 8
        %s273 = scalar_lea.vmem %s0, %s272
        %p274 = pneg %p43
        %p275 = pneg %p40
        %p276 = pneg %p64
        %p277 = pneg %p61
        %p278 = pneg %p85
        %p279 = pneg %p82
        %p280 = pneg %p106
        %p281 = pneg %p103
        %p282 = pneg %p127
        %p283 = pneg %p124
        %p284 = pneg %p148
        %p285 = pneg %p145
        %p286 = pneg %p169
        %p287 = pneg %p166
        %p288 = pneg %p190
        %p289 = pneg %p187
        %p290 = pneg %p216
        %p291 = pneg %p213
        %s292 = sand.u32 %s203, 1
        %s293 = scalar_lea.sflag [#allocation3], %s292
        %s294 = sand.u32 %s203, 1
        %s295 = smul.addr %s294, 8
        %s296 = scalar_lea.vmem [#allocation2], %s295
        %p297 = scmp.lt.s32.totalorder %s22, 1
        %s298 = scalar_select %p297, %s22, 1
        %s299 = smul.addr %s298, 8
        %s300 = scalar_lea.vmem %s0, %s299
        %v301 = vld [vmem:[%s1] sm:$0x1]
        %v302 = vld [vmem:[%s1 + $0x1] sm:$0x1]
        %v303 = vld [vmem:[%s1 + $0x2] sm:$0x1]
        %v304 = vld [vmem:[%s1 + $0x3] sm:$0x1]
        %v305 = vld [vmem:[%s1 + $0x4] sm:$0x1]
        %v306 = vld [vmem:[%s1 + $0x5] sm:$0x1]
        %v307 = vld [vmem:[%s300] sm:$0xff]
        %vm308 = vcmask 261120
        %v309 = vsel %vm308, %v307, 0.0
        %310 = vadd.xlane.f32.xlu0 %v309
        %v311 = vpop.xlane.xlu0 %310
        %v312 = vrcp.pop 32.0
        %v313 = vmul.f32 %v311, %v312
        %v314 = vsub.f32 %v307, %v313
        %v315 = vmul.f32 %v314, %v314
        %v316 = vsel %vm308, %v315, 0.0
        %317 = vadd.xlane.f32.xlu0 %v316
        %v318 = vpop.xlane.xlu0 %317
        %v319 = vmul.f32 %v318, 0.032258064
        %v320 = vrsqrt.pop %v319
        %v321 = vmul.f32 %v319, %v320
        %vm322 = vcmp.eq.f32.partialorder %v319, inf
        %v323 = vsel %vm322, %v319, %v321
        %vm324 = vcmp.eq.f32.partialorder %v319, 0.0
        %v325 = vand.u32 %v319, 2147483648
        %v326 = vsel %vm324, %v325, %v323
        %v327 = vadd.f32 %v326, 1e-05
        %v328 = vrcp.pop %v327
        %v329 = vmul.f32 %v314, %v328
        %v330 = vlaneseq
        %v331 = vshrl.u32 %v330, 7
        %v332 = vsub.s32 0, %v331
        %v333 = vrot.slane %v301, %v332
        %v334 = vmul.f32 %v329, %v333
        %v335 = vlaneseq
        %v336 = vshrl.u32 %v335, 7
        %v337 = vsub.s32 0, %v336
        %v338 = vrot.slane %v302, %v337
        %v339 = vadd.f32 %v334, %v338
        %v340 = vld [vmem:[%s2] sm:$0xff]
        %v341 = vld [vmem:[%s2 + $0x8] sm:$0xff]
        %v342 = vld [vmem:[%s2 + $0x10] sm:$0xff]
        %v343 = vld [vmem:[%s2 + $0x18] sm:$0xff]
        %v344 = vld [vmem:[%s3] sm:$0x1]
        %v346 = vlaneseq
        %v347 = vshrl.u32 %v346, 7
        %v348 = vsub.s32 0, %v347
        %v349 = vrot.slane %v344, %v348
        %v352 = vsel %vm308, %v339, 0
        %354 = vmatprep.subr.mxu0 0.0
        %355 = vmatpush1.msra.mxu0 0.0
        %356 = vmatprep.subr.mxu0 0.0
        %357 = vmatpush1.msra.mxu0 0.0
        %358 = vmatprep.subr.mxu0 0.0
        %359 = vmatpush1.msra.mxu0 0.0
        %360 = vmatprep.subr.mxu0 0.0
        %361 = vmatpush1.msra.mxu0 0.0
        %362 = vmatprep.subr.mxu0 0.0
        %363 = vmatpush1.msra.mxu0 0.0
        %364 = vmatprep.subr.mxu0 0.0
        %365 = vmatpush1.msra.mxu0 0.0
        %366 = vmatprep.subr.mxu0 0.0
        %367 = vmatpush1.msra.mxu0 0.0
        %368 = vmatprep.subr.mxu0 0.0
        %369 = vmatpush1.msra.mxu0 0.0
        %370 = vmatprep.subr.mxu0 0.0
        %371 = vmatpush1.msra.mxu0 0.0
        %372 = vmatprep.subr.mxu0 0.0
        %373 = vmatpush1.msra.mxu0 0.0
        %374 = vmatprep.subr.mxu0 0.0
        %375 = vmatpush1.msra.mxu0 0.0
        %376 = vmatprep.subr.mxu0 0.0
        %377 = vmatpush1.msra.mxu0 0.0
        %378 = vmatprep.subr.mxu0 0.0
        %379 = vmatpush1.msra.mxu0 %v343
        %380 = vmatprep.subr.mxu0 0.0
        %381 = vmatpush1.msra.mxu0 %v342
        %382 = vmatprep.subr.mxu0 0.0
        %383 = vmatpush1.msra.mxu0 %v341
        %384 = vmatprep.subr.mxu0 0.0
        %385 = vmatpush1.msra.mxu0 %v340
        %386 = vmatprep.subr.mxu0 0.0
        %387 = vmatpush2.msra.mxu0 0.0
        %388 = vmatprep.subr.mxu0 0.0
        %389 = vmatpush2.msra.mxu0 0.0
        %390 = vmatprep.subr.mxu0 0.0
        %391 = vmatpush2.msra.mxu0 0.0
        %392 = vmatprep.subr.mxu0 0.0
        %393 = vmatpush2.msra.mxu0 0.0
        %394 = vmatprep.subr.mxu0 0.0
        %395 = vmatpush2.msra.mxu0 0.0
        %396 = vmatprep.subr.mxu0 0.0
        %397 = vmatpush2.msra.mxu0 0.0
        %398 = vmatprep.subr.mxu0 0.0
        %399 = vmatpush2.msra.mxu0 0.0
        %400 = vmatprep.subr.mxu0 0.0
        %401 = vmatpush2.msra.mxu0 0.0
        %402 = vmatprep.subr.mxu0 0.0
        %403 = vmatpush2.msra.mxu0 0.0
        %404 = vmatprep.subr.mxu0 0.0
        %405 = vmatpush2.msra.mxu0 0.0
        %406 = vmatprep.subr.mxu0 0.0
        %407 = vmatpush2.msra.mxu0 0.0
        %408 = vmatprep.subr.mxu0 0.0
        %409 = vmatpush2.msra.mxu0 0.0
        %410 = vmatprep.subr.mxu0 0.0
        %411 = vmatpush2.msra.mxu0 0.0
        %412 = vmatprep.subr.mxu0 0.0
        %413 = vmatpush2.msra.mxu0 0.0
        %414 = vmatprep.subr.mxu0 0.0
        %415 = vmatpush2.msra.mxu0 0.0
        %416 = vmatprep.subr.mxu0 0.0
        %417 = vmatpush2.msra.mxu0 0.0
        %418 = vmatprep.mubr.f32.mxu0 0.0
        %419 = vmatmul.mubr.f32.gmra.mxu0 %v352
        %v420 = vpop.f32.mrf.mxu0
        %v421 = vadd.f32 %v349, %v420
        %v422 = vpop.f32.mrf.mxu0
        %423 = vdwg.mxu0
        %425 = vrot.lane.b32.xlu0 %v421, 120
        %v426 = vpop.permute.xlu0 %425
        %427 = vrot.lane.b32.xlu0 %v421, 112
        %v428 = vpop.permute.xlu0 %427
        %429 = vrot.lane.b32.xlu0 %v421, 104
        %v430 = vpop.permute.xlu0 %429
        %v431 = vlaneseq
        %v432 = vshrl.u32 %v431, 7
        %v433 = vlaneseq
        %v434 = vand.u32 %v433, 127
        %vm435 = vcmp.le.s32.totalorder %v434, %v432
        %v436 = vsel %vm435, 0.0, -100000.0
        %437 = vrot.lane.b32.xlu0 %v421, 96
        %v438 = vpop.permute.xlu0 %437
        %vm439 = vcmask 64512
        %v440 = vsel %vm439, %v421, 0
        %v442 = vsel %vm439, %v438, 0
        %444 = vmatprep.subr.mxu0 0.0
        %445 = vmatpush1.xpose.msra.mxu0 0.0
        %446 = vmatprep.subr.mxu0 0.0
        %447 = vmatpush1.xpose.msra.mxu0 0.0
        %448 = vmatprep.subr.mxu0 0.0
        %449 = vmatpush1.xpose.msra.mxu0 0.0
        %450 = vmatprep.subr.mxu0 0.0
        %451 = vmatpush1.xpose.msra.mxu0 0.0
        %452 = vmatprep.subr.mxu0 0.0
        %453 = vmatpush1.xpose.msra.mxu0 0.0
        %454 = vmatprep.subr.mxu0 0.0
        %455 = vmatpush1.xpose.msra.mxu0 0.0
        %456 = vmatprep.subr.mxu0 0.0
        %457 = vmatpush1.xpose.msra.mxu0 0.0
        %458 = vmatprep.subr.mxu0 0.0
        %459 = vmatpush1.xpose.msra.mxu0 0.0
        %460 = vmatprep.subr.mxu0 0.0
        %461 = vmatpush1.xpose.msra.mxu0 0.0
        %462 = vmatprep.subr.mxu0 0.0
        %463 = vmatpush1.xpose.msra.mxu0 0.0
        %464 = vmatprep.subr.mxu0 0.0
        %465 = vmatpush1.xpose.msra.mxu0 0.0
        %466 = vmatprep.subr.mxu0 0.0
        %467 = vmatpush1.xpose.msra.mxu0 0.0
        %468 = vmatprep.subr.mxu0 0.0
        %469 = vmatpush1.xpose.msra.mxu0 0.0
        %470 = vmatprep.subr.mxu0 0.0
        %471 = vmatpush1.xpose.msra.mxu0 0.0
        %472 = vmatprep.subr.mxu0 0.0
        %473 = vmatpush1.xpose.msra.mxu0 0.0
        %474 = vmatprep.subr.mxu0 0.0
        %475 = vmatpush1.xpose.msra.mxu0 %v442
        %476 = vmatprep.subr.mxu0 0.0
        %477 = vmatpush2.xpose.msra.mxu0 0.0
        %478 = vmatprep.subr.mxu0 0.0
        %479 = vmatpush2.xpose.msra.mxu0 0.0
        %480 = vmatprep.subr.mxu0 0.0
        %481 = vmatpush2.xpose.msra.mxu0 0.0
        %482 = vmatprep.subr.mxu0 0.0
        %483 = vmatpush2.xpose.msra.mxu0 0.0
        %484 = vmatprep.subr.mxu0 0.0
        %485 = vmatpush2.xpose.msra.mxu0 0.0
        %486 = vmatprep.subr.mxu0 0.0
        %487 = vmatpush2.xpose.msra.mxu0 0.0
        %488 = vmatprep.subr.mxu0 0.0
        %489 = vmatpush2.xpose.msra.mxu0 0.0
        %490 = vmatprep.subr.mxu0 0.0
        %491 = vmatpush2.xpose.msra.mxu0 0.0
        %492 = vmatprep.subr.mxu0 0.0
        %493 = vmatpush2.xpose.msra.mxu0 0.0
        %494 = vmatprep.subr.mxu0 0.0
        %495 = vmatpush2.xpose.msra.mxu0 0.0
        %496 = vmatprep.subr.mxu0 0.0
        %497 = vmatpush2.xpose.msra.mxu0 0.0
        %498 = vmatprep.subr.mxu0 0.0
        %499 = vmatpush2.xpose.msra.mxu0 0.0
        %500 = vmatprep.subr.mxu0 0.0
        %501 = vmatpush2.xpose.msra.mxu0 0.0
        %502 = vmatprep.subr.mxu0 0.0
        %503 = vmatpush2.xpose.msra.mxu0 0.0
        %504 = vmatprep.subr.mxu0 0.0
        %505 = vmatpush2.xpose.msra.mxu0 0.0
        %506 = vmatprep.subr.mxu0 0.0
        %507 = vmatpush2.xpose.msra.mxu0 0.0
        %508 = vmatprep.mubr.f32.mxu0 0.0
        %509 = vmatmul.mubr.f32.gmra.mxu0 %v440
        %v510 = vpop.f32.mrf.mxu0
        %v511 = vadd.f32 %v436, %v510
        %v512 = vpop.f32.mrf.mxu0
        %513 = vdwg.mxu0
        %514 = vrot.lane.b32.xlu0 %v426, 96
        %v515 = vpop.permute.xlu0 %514
        %v516 = vsel %vm439, %v426, 0
        %v518 = vsel %vm439, %v515, 0
        %520 = vmatprep.subr.mxu0 0.0
        %521 = vmatpush1.xpose.msra.mxu0 0.0
        %522 = vmatprep.subr.mxu0 0.0
        %523 = vmatpush1.xpose.msra.mxu0 0.0
        %524 = vmatprep.subr.mxu0 0.0
        %525 = vmatpush1.xpose.msra.mxu0 0.0
        %526 = vmatprep.subr.mxu0 0.0
        %527 = vmatpush1.xpose.msra.mxu0 0.0
        %528 = vmatprep.subr.mxu0 0.0
        %529 = vmatpush1.xpose.msra.mxu0 0.0
        %530 = vmatprep.subr.mxu0 0.0
        %531 = vmatpush1.xpose.msra.mxu0 0.0
        %532 = vmatprep.subr.mxu0 0.0
        %533 = vmatpush1.xpose.msra.mxu0 0.0
        %534 = vmatprep.subr.mxu0 0.0
        %535 = vmatpush1.xpose.msra.mxu0 0.0
        %536 = vmatprep.subr.mxu0 0.0
        %537 = vmatpush1.xpose.msra.mxu0 0.0
        %538 = vmatprep.subr.mxu0 0.0
        %539 = vmatpush1.xpose.msra.mxu0 0.0
        %540 = vmatprep.subr.mxu0 0.0
        %541 = vmatpush1.xpose.msra.mxu0 0.0
        %542 = vmatprep.subr.mxu0 0.0
        %543 = vmatpush1.xpose.msra.mxu0 0.0
        %544 = vmatprep.subr.mxu0 0.0
        %545 = vmatpush1.xpose.msra.mxu0 0.0
        %546 = vmatprep.subr.mxu0 0.0
        %547 = vmatpush1.xpose.msra.mxu0 0.0
        %548 = vmatprep.subr.mxu0 0.0
        %549 = vmatpush1.xpose.msra.mxu0 0.0
        %550 = vmatprep.subr.mxu0 0.0
        %551 = vmatpush1.xpose.msra.mxu0 %v518
        %552 = vmatprep.subr.mxu0 0.0
        %553 = vmatpush2.xpose.msra.mxu0 0.0
        %554 = vmatprep.subr.mxu0 0.0
        %555 = vmatpush2.xpose.msra.mxu0 0.0
        %556 = vmatprep.subr.mxu0 0.0
        %557 = vmatpush2.xpose.msra.mxu0 0.0
        %558 = vmatprep.subr.mxu0 0.0
        %559 = vmatpush2.xpose.msra.mxu0 0.0
        %560 = vmatprep.subr.mxu0 0.0
        %561 = vmatpush2.xpose.msra.mxu0 0.0
        %562 = vmatprep.subr.mxu0 0.0
        %563 = vmatpush2.xpose.msra.mxu0 0.0
        %564 = vmatprep.subr.mxu0 0.0
        %565 = vmatpush2.xpose.msra.mxu0 0.0
        %566 = vmatprep.subr.mxu0 0.0
        %567 = vmatpush2.xpose.msra.mxu0 0.0
        %568 = vmatprep.subr.mxu0 0.0
        %569 = vmatpush2.xpose.msra.mxu0 0.0
        %570 = vmatprep.subr.mxu0 0.0
        %571 = vmatpush2.xpose.msra.mxu0 0.0
        %572 = vmatprep.subr.mxu0 0.0
        %573 = vmatpush2.xpose.msra.mxu0 0.0
        %574 = vmatprep.subr.mxu0 0.0
        %575 = vmatpush2.xpose.msra.mxu0 0.0
        %576 = vmatprep.subr.mxu0 0.0
        %577 = vmatpush2.xpose.msra.mxu0 0.0
        %578 = vmatprep.subr.mxu0 0.0
        %579 = vmatpush2.xpose.msra.mxu0 0.0
        %580 = vmatprep.subr.mxu0 0.0
        %581 = vmatpush2.xpose.msra.mxu0 0.0
        %582 = vmatprep.subr.mxu0 0.0
        %583 = vmatpush2.xpose.msra.mxu0 0.0
        %584 = vmatprep.mubr.f32.mxu0 0.0
        %585 = vmatmul.mubr.f32.gmra.mxu0 %v516
        %v586 = vpop.f32.mrf.mxu0
        %v587 = vadd.f32 %v436, %v586
        %v588 = vpop.f32.mrf.mxu0
        %589 = vdwg.mxu0
        %590 = vrot.lane.b32.xlu0 %v428, 96
        %v591 = vpop.permute.xlu0 %590
        %v592 = vsel %vm439, %v428, 0
        %v594 = vsel %vm439, %v591, 0
        %596 = vmatprep.subr.mxu0 0.0
        %597 = vmatpush1.xpose.msra.mxu0 0.0
        %598 = vmatprep.subr.mxu0 0.0
        %599 = vmatpush1.xpose.msra.mxu0 0.0
        %600 = vmatprep.subr.mxu0 0.0
        %601 = vmatpush1.xpose.msra.mxu0 0.0
        %602 = vmatprep.subr.mxu0 0.0
        %603 = vmatpush1.xpose.msra.mxu0 0.0
        %604 = vmatprep.subr.mxu0 0.0
        %605 = vmatpush1.xpose.msra.mxu0 0.0
        %606 = vmatprep.subr.mxu0 0.0
        %607 = vmatpush1.xpose.msra.mxu0 0.0
        %608 = vmatprep.subr.mxu0 0.0
        %609 = vmatpush1.xpose.msra.mxu0 0.0
        %610 = vmatprep.subr.mxu0 0.0
        %611 = vmatpush1.xpose.msra.mxu0 0.0
        %612 = vmatprep.subr.mxu0 0.0
        %613 = vmatpush1.xpose.msra.mxu0 0.0
        %614 = vmatprep.subr.mxu0 0.0
        %615 = vmatpush1.xpose.msra.mxu0 0.0
        %616 = vmatprep.subr.mxu0 0.0
        %617 = vmatpush1.xpose.msra.mxu0 0.0
        %618 = vmatprep.subr.mxu0 0.0
        %619 = vmatpush1.xpose.msra.mxu0 0.0
        %620 = vmatprep.subr.mxu0 0.0
        %621 = vmatpush1.xpose.msra.mxu0 0.0
        %622 = vmatprep.subr.mxu0 0.0
        %623 = vmatpush1.xpose.msra.mxu0 0.0
        %624 = vmatprep.subr.mxu0 0.0
        %625 = vmatpush1.xpose.msra.mxu0 0.0
        %626 = vmatprep.subr.mxu0 0.0
        %627 = vmatpush1.xpose.msra.mxu0 %v594
        %628 = vmatprep.subr.mxu0 0.0
        %629 = vmatpush2.xpose.msra.mxu0 0.0
        %630 = vmatprep.subr.mxu0 0.0
        %631 = vmatpush2.xpose.msra.mxu0 0.0
        %632 = vmatprep.subr.mxu0 0.0
        %633 = vmatpush2.xpose.msra.mxu0 0.0
        %634 = vmatprep.subr.mxu0 0.0
        %635 = vmatpush2.xpose.msra.mxu0 0.0
        %636 = vmatprep.subr.mxu0 0.0
        %637 = vmatpush2.xpose.msra.mxu0 0.0
        %638 = vmatprep.subr.mxu0 0.0
        %639 = vmatpush2.xpose.msra.mxu0 0.0
        %640 = vmatprep.subr.mxu0 0.0
        %641 = vmatpush2.xpose.msra.mxu0 0.0
        %642 = vmatprep.subr.mxu0 0.0
        %643 = vmatpush2.xpose.msra.mxu0 0.0
        %644 = vmatprep.subr.mxu0 0.0
        %645 = vmatpush2.xpose.msra.mxu0 0.0
        %646 = vmatprep.subr.mxu0 0.0
        %647 = vmatpush2.xpose.msra.mxu0 0.0
        %648 = vmatprep.subr.mxu0 0.0
        %649 = vmatpush2.xpose.msra.mxu0 0.0
        %650 = vmatprep.subr.mxu0 0.0
        %651 = vmatpush2.xpose.msra.mxu0 0.0
        %652 = vmatprep.subr.mxu0 0.0
        %653 = vmatpush2.xpose.msra.mxu0 0.0
        %654 = vmatprep.subr.mxu0 0.0
        %655 = vmatpush2.xpose.msra.mxu0 0.0
        %656 = vmatprep.subr.mxu0 0.0
        %657 = vmatpush2.xpose.msra.mxu0 0.0
        %658 = vmatprep.subr.mxu0 0.0
        %659 = vmatpush2.xpose.msra.mxu0 0.0
        %660 = vmatprep.mubr.f32.mxu0 0.0
        %661 = vmatmul.mubr.f32.gmra.mxu0 %v592
        %v662 = vpop.f32.mrf.mxu0
        %v663 = vadd.f32 %v436, %v662
        %v664 = vpop.f32.mrf.mxu0
        %665 = vdwg.mxu0
        %666 = vrot.lane.b32.xlu0 %v430, 96
        %v667 = vpop.permute.xlu0 %666
        %v668 = vsel %vm439, %v430, 0
        %v670 = vsel %vm439, %v667, 0
        %672 = vmatprep.subr.mxu0 0.0
        %673 = vmatpush1.xpose.msra.mxu0 0.0
        %674 = vmatprep.subr.mxu0 0.0
        %675 = vmatpush1.xpose.msra.mxu0 0.0
        %676 = vmatprep.subr.mxu0 0.0
        %677 = vmatpush1.xpose.msra.mxu0 0.0
        %678 = vmatprep.subr.mxu0 0.0
        %679 = vmatpush1.xpose.msra.mxu0 0.0
        %680 = vmatprep.subr.mxu0 0.0
        %681 = vmatpush1.xpose.msra.mxu0 0.0
        %682 = vmatprep.subr.mxu0 0.0
        %683 = vmatpush1.xpose.msra.mxu0 0.0
        %684 = vmatprep.subr.mxu0 0.0
        %685 = vmatpush1.xpose.msra.mxu0 0.0
        %686 = vmatprep.subr.mxu0 0.0
        %687 = vmatpush1.xpose.msra.mxu0 0.0
        %688 = vmatprep.subr.mxu0 0.0
        %689 = vmatpush1.xpose.msra.mxu0 0.0
        %690 = vmatprep.subr.mxu0 0.0
        %691 = vmatpush1.xpose.msra.mxu0 0.0
        %692 = vmatprep.subr.mxu0 0.0
        %693 = vmatpush1.xpose.msra.mxu0 0.0
        %694 = vmatprep.subr.mxu0 0.0
        %695 = vmatpush1.xpose.msra.mxu0 0.0
        %696 = vmatprep.subr.mxu0 0.0
        %697 = vmatpush1.xpose.msra.mxu0 0.0
        %698 = vmatprep.subr.mxu0 0.0
        %699 = vmatpush1.xpose.msra.mxu0 0.0
        %700 = vmatprep.subr.mxu0 0.0
        %701 = vmatpush1.xpose.msra.mxu0 0.0
        %702 = vmatprep.subr.mxu0 0.0
        %703 = vmatpush1.xpose.msra.mxu0 %v670
        %704 = vmatprep.subr.mxu0 0.0
        %705 = vmatpush2.xpose.msra.mxu0 0.0
        %706 = vmatprep.subr.mxu0 0.0
        %707 = vmatpush2.xpose.msra.mxu0 0.0
        %708 = vmatprep.subr.mxu0 0.0
        %709 = vmatpush2.xpose.msra.mxu0 0.0
        %710 = vmatprep.subr.mxu0 0.0
        %711 = vmatpush2.xpose.msra.mxu0 0.0
        %712 = vmatprep.subr.mxu0 0.0
        %713 = vmatpush2.xpose.msra.mxu0 0.0
        %714 = vmatprep.subr.mxu0 0.0
        %715 = vmatpush2.xpose.msra.mxu0 0.0
        %716 = vmatprep.subr.mxu0 0.0
        %717 = vmatpush2.xpose.msra.mxu0 0.0
        %718 = vmatprep.subr.mxu0 0.0
        %719 = vmatpush2.xpose.msra.mxu0 0.0
        %720 = vmatprep.subr.mxu0 0.0
        %721 = vmatpush2.xpose.msra.mxu0 0.0
        %722 = vmatprep.subr.mxu0 0.0
        %723 = vmatpush2.xpose.msra.mxu0 0.0
        %724 = vmatprep.subr.mxu0 0.0
        %725 = vmatpush2.xpose.msra.mxu0 0.0
        %726 = vmatprep.subr.mxu0 0.0
        %727 = vmatpush2.xpose.msra.mxu0 0.0
        %728 = vmatprep.subr.mxu0 0.0
        %729 = vmatpush2.xpose.msra.mxu0 0.0
        %730 = vmatprep.subr.mxu0 0.0
        %731 = vmatpush2.xpose.msra.mxu0 0.0
        %732 = vmatprep.subr.mxu0 0.0
        %733 = vmatpush2.xpose.msra.mxu0 0.0
        %734 = vmatprep.subr.mxu0 0.0
        %735 = vmatpush2.xpose.msra.mxu0 0.0
        %736 = vmatprep.mubr.f32.mxu0 0.0
        %737 = vmatmul.mubr.f32.gmra.mxu0 %v668
        %v738 = vpop.f32.mrf.mxu0
        %v739 = vadd.f32 %v436, %v738
        %v740 = vpop.f32.mrf.mxu0
        %741 = vdwg.mxu0
        %v742 = vsel %vm439, %v511, -inf
        %743 = vmax.xlane.f32.xlu0 %v742
        %v744 = vpop.xlane.xlu0 %743
        %v745 = vsel %vm439, %v587, -inf
        %746 = vmax.xlane.f32.xlu0 %v745
        %v747 = vpop.xlane.xlu0 %746
        %v748 = vsel %vm439, %v663, -inf
        %749 = vmax.xlane.f32.xlu0 %v748
        %v750 = vpop.xlane.xlu0 %749
        %v751 = vsel %vm439, %v739, -inf
        %752 = vmax.xlane.f32.xlu0 %v751
        %v753 = vpop.xlane.xlu0 %752
        %v754 = vsub.f32 %v511, %v744
        %v755 = vsub.f32 %v587, %v747
        %v756 = vsub.f32 %v663, %v750
        %v757 = vsub.f32 %v739, %v753
        %v758 = vmul.f32 %v754, 1.442695
        %v759 = vpow.pop %v758
        %v760 = vmul.f32 %v755, 1.442695
        %v761 = vpow.pop %v760
        %v762 = vmul.f32 %v756, 1.442695
        %v763 = vpow.pop %v762
        %v764 = vmul.f32 %v757, 1.442695
        %v765 = vpow.pop %v764
        %v766 = vsel %vm439, %v759, 0.0
        %767 = vadd.xlane.f32.xlu0 %v766
        %v768 = vpop.xlane.xlu0 %767
        %v769 = vsel %vm439, %v761, 0.0
        %770 = vadd.xlane.f32.xlu0 %v769
        %v771 = vpop.xlane.xlu0 %770
        %v772 = vsel %vm439, %v763, 0.0
        %773 = vadd.xlane.f32.xlu0 %v772
        %v774 = vpop.xlane.xlu0 %773
        %v775 = vsel %vm439, %v765, 0.0
        %776 = vadd.xlane.f32.xlu0 %v775
        %v777 = vpop.xlane.xlu0 %776
        %v778 = vrcp.pop %v768
        %v779 = vrcp.pop %v771
        %v780 = vrcp.pop %v774
        %v781 = vrcp.pop %v777
        %v782 = vmul.f32 %v759, %v778
        %v783 = vmul.f32 %v761, %v779
        %v784 = vmul.f32 %v763, %v780
        %v785 = vmul.f32 %v765, %v781
        %786 = vrot.lane.b32.xlu0 %v421, 64
        %v787 = vpop.permute.xlu0 %786
        %v790 = vsel %vm439, %v782, 0
        %792 = vmatprep.subr.mxu0 0.0
        %793 = vmatpush1.msra.mxu0 0.0
        %794 = vmatprep.subr.mxu0 0.0
        %795 = vmatpush1.msra.mxu0 0.0
        %796 = vmatprep.subr.mxu0 0.0
        %797 = vmatpush1.msra.mxu0 0.0
        %798 = vmatprep.subr.mxu0 0.0
        %799 = vmatpush1.msra.mxu0 0.0
        %800 = vmatprep.subr.mxu0 0.0
        %801 = vmatpush1.msra.mxu0 0.0
        %802 = vmatprep.subr.mxu0 0.0
        %803 = vmatpush1.msra.mxu0 0.0
        %804 = vmatprep.subr.mxu0 0.0
        %805 = vmatpush1.msra.mxu0 0.0
        %806 = vmatprep.subr.mxu0 0.0
        %807 = vmatpush1.msra.mxu0 0.0
        %808 = vmatprep.subr.mxu0 0.0
        %809 = vmatpush1.msra.mxu0 0.0
        %810 = vmatprep.subr.mxu0 0.0
        %811 = vmatpush1.msra.mxu0 0.0
        %812 = vmatprep.subr.mxu0 0.0
        %813 = vmatpush1.msra.mxu0 0.0
        %814 = vmatprep.subr.mxu0 0.0
        %815 = vmatpush1.msra.mxu0 0.0
        %816 = vmatprep.subr.mxu0 0.0
        %817 = vmatpush1.msra.mxu0 0.0
        %818 = vmatprep.subr.mxu0 0.0
        %819 = vmatpush1.msra.mxu0 0.0
        %820 = vmatprep.subr.mxu0 0.0
        %821 = vmatpush1.msra.mxu0 0.0
        %822 = vmatprep.subr.mxu0 0.0
        %823 = vmatpush1.msra.mxu0 %v787
        %824 = vmatprep.subr.mxu0 0.0
        %825 = vmatpush2.msra.mxu0 0.0
        %826 = vmatprep.subr.mxu0 0.0
        %827 = vmatpush2.msra.mxu0 0.0
        %828 = vmatprep.subr.mxu0 0.0
        %829 = vmatpush2.msra.mxu0 0.0
        %830 = vmatprep.subr.mxu0 0.0
        %831 = vmatpush2.msra.mxu0 0.0
        %832 = vmatprep.subr.mxu0 0.0
        %833 = vmatpush2.msra.mxu0 0.0
        %834 = vmatprep.subr.mxu0 0.0
        %835 = vmatpush2.msra.mxu0 0.0
        %836 = vmatprep.subr.mxu0 0.0
        %837 = vmatpush2.msra.mxu0 0.0
        %838 = vmatprep.subr.mxu0 0.0
        %839 = vmatpush2.msra.mxu0 0.0
        %840 = vmatprep.subr.mxu0 0.0
        %841 = vmatpush2.msra.mxu0 0.0
        %842 = vmatprep.subr.mxu0 0.0
        %843 = vmatpush2.msra.mxu0 0.0
        %844 = vmatprep.subr.mxu0 0.0
        %845 = vmatpush2.msra.mxu0 0.0
        %846 = vmatprep.subr.mxu0 0.0
        %847 = vmatpush2.msra.mxu0 0.0
        %848 = vmatprep.subr.mxu0 0.0
        %849 = vmatpush2.msra.mxu0 0.0
        %850 = vmatprep.subr.mxu0 0.0
        %851 = vmatpush2.msra.mxu0 0.0
        %852 = vmatprep.subr.mxu0 0.0
        %853 = vmatpush2.msra.mxu0 0.0
        %854 = vmatprep.subr.mxu0 0.0
        %855 = vmatpush2.msra.mxu0 0.0
        %856 = vmatprep.mubr.f32.mxu0 0.0
        %857 = vmatmul.mubr.f32.gmra.mxu0 %v790
        %v858 = vpop.f32.mrf.mxu0
        %v859 = vadd.f32 0.0, %v858
        %v860 = vpop.f32.mrf.mxu0
        %861 = vdwg.mxu0
        %862 = vrot.lane.b32.xlu0 %v426, 64
        %v863 = vpop.permute.xlu0 %862
        %v866 = vsel %vm439, %v783, 0
        %868 = vmatprep.subr.mxu0 0.0
        %869 = vmatpush1.msra.mxu0 0.0
        %870 = vmatprep.subr.mxu0 0.0
        %871 = vmatpush1.msra.mxu0 0.0
        %872 = vmatprep.subr.mxu0 0.0
        %873 = vmatpush1.msra.mxu0 0.0
        %874 = vmatprep.subr.mxu0 0.0
        %875 = vmatpush1.msra.mxu0 0.0
        %876 = vmatprep.subr.mxu0 0.0
        %877 = vmatpush1.msra.mxu0 0.0
        %878 = vmatprep.subr.mxu0 0.0
        %879 = vmatpush1.msra.mxu0 0.0
        %880 = vmatprep.subr.mxu0 0.0
        %881 = vmatpush1.msra.mxu0 0.0
        %882 = vmatprep.subr.mxu0 0.0
        %883 = vmatpush1.msra.mxu0 0.0
        %884 = vmatprep.subr.mxu0 0.0
        %885 = vmatpush1.msra.mxu0 0.0
        %886 = vmatprep.subr.mxu0 0.0
        %887 = vmatpush1.msra.mxu0 0.0
        %888 = vmatprep.subr.mxu0 0.0
        %889 = vmatpush1.msra.mxu0 0.0
        %890 = vmatprep.subr.mxu0 0.0
        %891 = vmatpush1.msra.mxu0 0.0
        %892 = vmatprep.subr.mxu0 0.0
        %893 = vmatpush1.msra.mxu0 0.0
        %894 = vmatprep.subr.mxu0 0.0
        %895 = vmatpush1.msra.mxu0 0.0
        %896 = vmatprep.subr.mxu0 0.0
        %897 = vmatpush1.msra.mxu0 0.0
        %898 = vmatprep.subr.mxu0 0.0
        %899 = vmatpush1.msra.mxu0 %v863
        %900 = vmatprep.subr.mxu0 0.0
        %901 = vmatpush2.msra.mxu0 0.0
        %902 = vmatprep.subr.mxu0 0.0
        %903 = vmatpush2.msra.mxu0 0.0
        %904 = vmatprep.subr.mxu0 0.0
        %905 = vmatpush2.msra.mxu0 0.0
        %906 = vmatprep.subr.mxu0 0.0
        %907 = vmatpush2.msra.mxu0 0.0
        %908 = vmatprep.subr.mxu0 0.0
        %909 = vmatpush2.msra.mxu0 0.0
        %910 = vmatprep.subr.mxu0 0.0
        %911 = vmatpush2.msra.mxu0 0.0
        %912 = vmatprep.subr.mxu0 0.0
        %913 = vmatpush2.msra.mxu0 0.0
        %914 = vmatprep.subr.mxu0 0.0
        %915 = vmatpush2.msra.mxu0 0.0
        %916 = vmatprep.subr.mxu0 0.0
        %917 = vmatpush2.msra.mxu0 0.0
        %918 = vmatprep.subr.mxu0 0.0
        %919 = vmatpush2.msra.mxu0 0.0
        %920 = vmatprep.subr.mxu0 0.0
        %921 = vmatpush2.msra.mxu0 0.0
        %922 = vmatprep.subr.mxu0 0.0
        %923 = vmatpush2.msra.mxu0 0.0
        %924 = vmatprep.subr.mxu0 0.0
        %925 = vmatpush2.msra.mxu0 0.0
        %926 = vmatprep.subr.mxu0 0.0
        %927 = vmatpush2.msra.mxu0 0.0
        %928 = vmatprep.subr.mxu0 0.0
        %929 = vmatpush2.msra.mxu0 0.0
        %930 = vmatprep.subr.mxu0 0.0
        %931 = vmatpush2.msra.mxu0 0.0
        %932 = vmatprep.mubr.f32.mxu0 0.0
        %933 = vmatmul.mubr.f32.gmra.mxu0 %v866
        %v934 = vpop.f32.mrf.mxu0
        %v935 = vadd.f32 0.0, %v934
        %v936 = vpop.f32.mrf.mxu0
        %937 = vdwg.mxu0
        %938 = vrot.lane.b32.xlu0 %v428, 64
        %v939 = vpop.permute.xlu0 %938
        %v942 = vsel %vm439, %v784, 0
        %944 = vmatprep.subr.mxu0 0.0
        %945 = vmatpush1.msra.mxu0 0.0
        %946 = vmatprep.subr.mxu0 0.0
        %947 = vmatpush1.msra.mxu0 0.0
        %948 = vmatprep.subr.mxu0 0.0
        %949 = vmatpush1.msra.mxu0 0.0
        %950 = vmatprep.subr.mxu0 0.0
        %951 = vmatpush1.msra.mxu0 0.0
        %952 = vmatprep.subr.mxu0 0.0
        %953 = vmatpush1.msra.mxu0 0.0
        %954 = vmatprep.subr.mxu0 0.0
        %955 = vmatpush1.msra.mxu0 0.0
        %956 = vmatprep.subr.mxu0 0.0
        %957 = vmatpush1.msra.mxu0 0.0
        %958 = vmatprep.subr.mxu0 0.0
        %959 = vmatpush1.msra.mxu0 0.0
        %960 = vmatprep.subr.mxu0 0.0
        %961 = vmatpush1.msra.mxu0 0.0
        %962 = vmatprep.subr.mxu0 0.0
        %963 = vmatpush1.msra.mxu0 0.0
        %964 = vmatprep.subr.mxu0 0.0
        %965 = vmatpush1.msra.mxu0 0.0
        %966 = vmatprep.subr.mxu0 0.0
        %967 = vmatpush1.msra.mxu0 0.0
        %968 = vmatprep.subr.mxu0 0.0
        %969 = vmatpush1.msra.mxu0 0.0
        %970 = vmatprep.subr.mxu0 0.0
        %971 = vmatpush1.msra.mxu0 0.0
        %972 = vmatprep.subr.mxu0 0.0
        %973 = vmatpush1.msra.mxu0 0.0
        %974 = vmatprep.subr.mxu0 0.0
        %975 = vmatpush1.msra.mxu0 %v939
        %976 = vmatprep.subr.mxu0 0.0
        %977 = vmatpush2.msra.mxu0 0.0
        %978 = vmatprep.subr.mxu0 0.0
        %979 = vmatpush2.msra.mxu0 0.0
        %980 = vmatprep.subr.mxu0 0.0
        %981 = vmatpush2.msra.mxu0 0.0
        %982 = vmatprep.subr.mxu0 0.0
        %983 = vmatpush2.msra.mxu0 0.0
        %984 = vmatprep.subr.mxu0 0.0
        %985 = vmatpush2.msra.mxu0 0.0
        %986 = vmatprep.subr.mxu0 0.0
        %987 = vmatpush2.msra.mxu0 0.0
        %988 = vmatprep.subr.mxu0 0.0
        %989 = vmatpush2.msra.mxu0 0.0
        %990 = vmatprep.subr.mxu0 0.0
        %991 = vmatpush2.msra.mxu0 0.0
        %992 = vmatprep.subr.mxu0 0.0
        %993 = vmatpush2.msra.mxu0 0.0
        %994 = vmatprep.subr.mxu0 0.0
        %995 = vmatpush2.msra.mxu0 0.0
        %996 = vmatprep.subr.mxu0 0.0
        %997 = vmatpush2.msra.mxu0 0.0
        %998 = vmatprep.subr.mxu0 0.0
        %999 = vmatpush2.msra.mxu0 0.0
        %1000 = vmatprep.subr.mxu0 0.0
        %1001 = vmatpush2.msra.mxu0 0.0
        %1002 = vmatprep.subr.mxu0 0.0
        %1003 = vmatpush2.msra.mxu0 0.0
        %1004 = vmatprep.subr.mxu0 0.0
        %1005 = vmatpush2.msra.mxu0 0.0
        %1006 = vmatprep.subr.mxu0 0.0
        %1007 = vmatpush2.msra.mxu0 0.0
        %1008 = vmatprep.mubr.f32.mxu0 0.0
        %1009 = vmatmul.mubr.f32.gmra.mxu0 %v942
        %v1010 = vpop.f32.mrf.mxu0
        %v1011 = vadd.f32 0.0, %v1010
        %v1012 = vpop.f32.mrf.mxu0
        %1013 = vdwg.mxu0
        %1014 = vrot.lane.b32.xlu0 %v430, 64
        %v1015 = vpop.permute.xlu0 %1014
        %v1018 = vsel %vm439, %v785, 0
        %1020 = vmatprep.subr.mxu0 0.0
        %1021 = vmatpush1.msra.mxu0 0.0
        %1022 = vmatprep.subr.mxu0 0.0
        %1023 = vmatpush1.msra.mxu0 0.0
        %1024 = vmatprep.subr.mxu0 0.0
        %1025 = vmatpush1.msra.mxu0 0.0
        %1026 = vmatprep.subr.mxu0 0.0
        %1027 = vmatpush1.msra.mxu0 0.0
        %1028 = vmatprep.subr.mxu0 0.0
        %1029 = vmatpush1.msra.mxu0 0.0
        %1030 = vmatprep.subr.mxu0 0.0
        %1031 = vmatpush1.msra.mxu0 0.0
        %1032 = vmatprep.subr.mxu0 0.0
        %1033 = vmatpush1.msra.mxu0 0.0
        %1034 = vmatprep.subr.mxu0 0.0
        %1035 = vmatpush1.msra.mxu0 0.0
        %1036 = vmatprep.subr.mxu0 0.0
        %1037 = vmatpush1.msra.mxu0 0.0
        %1038 = vmatprep.subr.mxu0 0.0
        %1039 = vmatpush1.msra.mxu0 0.0
        %1040 = vmatprep.subr.mxu0 0.0
        %1041 = vmatpush1.msra.mxu0 0.0
        %1042 = vmatprep.subr.mxu0 0.0
        %1043 = vmatpush1.msra.mxu0 0.0
        %1044 = vmatprep.subr.mxu0 0.0
        %1045 = vmatpush1.msra.mxu0 0.0
        %1046 = vmatprep.subr.mxu0 0.0
        %1047 = vmatpush1.msra.mxu0 0.0
        %1048 = vmatprep.subr.mxu0 0.0
        %1049 = vmatpush1.msra.mxu0 0.0
        %1050 = vmatprep.subr.mxu0 0.0
        %1051 = vmatpush1.msra.mxu0 %v1015
        %1052 = vmatprep.subr.mxu0 0.0
        %1053 = vmatpush2.msra.mxu0 0.0
        %1054 = vmatprep.subr.mxu0 0.0
        %1055 = vmatpush2.msra.mxu0 0.0
        %1056 = vmatprep.subr.mxu0 0.0
        %1057 = vmatpush2.msra.mxu0 0.0
        %1058 = vmatprep.subr.mxu0 0.0
        %1059 = vmatpush2.msra.mxu0 0.0
        %1060 = vmatprep.subr.mxu0 0.0
        %1061 = vmatpush2.msra.mxu0 0.0
        %1062 = vmatprep.subr.mxu0 0.0
        %1063 = vmatpush2.msra.mxu0 0.0
        %1064 = vmatprep.subr.mxu0 0.0
        %1065 = vmatpush2.msra.mxu0 0.0
        %1066 = vmatprep.subr.mxu0 0.0
        %1067 = vmatpush2.msra.mxu0 0.0
        %1068 = vmatprep.subr.mxu0 0.0
        %1069 = vmatpush2.msra.mxu0 0.0
        %1070 = vmatprep.subr.mxu0 0.0
        %1071 = vmatpush2.msra.mxu0 0.0
        %1072 = vmatprep.subr.mxu0 0.0
        %1073 = vmatpush2.msra.mxu0 0.0
        %1074 = vmatprep.subr.mxu0 0.0
        %1075 = vmatpush2.msra.mxu0 0.0
        %1076 = vmatprep.subr.mxu0 0.0
        %1077 = vmatpush2.msra.mxu0 0.0
        %1078 = vmatprep.subr.mxu0 0.0
        %1079 = vmatpush2.msra.mxu0 0.0
        %1080 = vmatprep.subr.mxu0 0.0
        %1081 = vmatpush2.msra.mxu0 0.0
        %1082 = vmatprep.subr.mxu0 0.0
        %1083 = vmatpush2.msra.mxu0 0.0
        %1084 = vmatprep.mubr.f32.mxu0 0.0
        %1085 = vmatmul.mubr.f32.gmra.mxu0 %v1018
        %v1086 = vpop.f32.mrf.mxu0
        %v1087 = vadd.f32 0.0, %v1086
        %v1088 = vpop.f32.mrf.mxu0
        %1089 = vdwg.mxu0
        %1091 = vrot.lane.b32.xlu0 %v935, 8
        %v1092 = vpop.permute.xlu0 %1091
        %1095 = vrot.lane.b32.xlu0 %v1011, 16
        %v1096 = vpop.permute.xlu0 %1095
        %1099 = vrot.lane.b32.xlu0 %v1087, 24
        %v1100 = vpop.permute.xlu0 %1099
        %v1102 = vsel %vm439, %v859, %v1092
        %vm1103 = vcmask 130048
        %v1104 = vsel %vm1103, %v1102, %v1096
        %vm1105 = vcmask 195584
        %v1106 = vsel %vm1105, %v1104, %v1100
        %v1107 = vld [vmem:[%s4] sm:$0xff]
        %v1108 = vld [vmem:[%s4 + $0x8] sm:$0xff]
        %v1109 = vld [vmem:[%s4 + $0x10] sm:$0xff]
        %v1110 = vld [vmem:[%s4 + $0x18] sm:$0xff]
        %v1111 = vlaneseq
        %v1112 = vshrl.u32 %v1111, 7
        %v1113 = vsub.s32 0, %v1112
        %v1114 = vrot.slane %v305, %v1113
        %v1116 = vsel %vm308, %v1106, 0
        %1118 = vmatprep.subr.mxu0 0.0
        %1119 = vmatpush1.msra.mxu0 0.0
        %1120 = vmatprep.subr.mxu0 0.0
        %1121 = vmatpush1.msra.mxu0 0.0
        %1122 = vmatprep.subr.mxu0 0.0
        %1123 = vmatpush1.msra.mxu0 0.0
        %1124 = vmatprep.subr.mxu0 0.0
        %1125 = vmatpush1.msra.mxu0 0.0
        %1126 = vmatprep.subr.mxu0 0.0
        %1127 = vmatpush1.msra.mxu0 0.0
        %1128 = vmatprep.subr.mxu0 0.0
        %1129 = vmatpush1.msra.mxu0 0.0
        %1130 = vmatprep.subr.mxu0 0.0
        %1131 = vmatpush1.msra.mxu0 0.0
        %1132 = vmatprep.subr.mxu0 0.0
        %1133 = vmatpush1.msra.mxu0 0.0
        %1134 = vmatprep.subr.mxu0 0.0
        %1135 = vmatpush1.msra.mxu0 0.0
        %1136 = vmatprep.subr.mxu0 0.0
        %1137 = vmatpush1.msra.mxu0 0.0
        %1138 = vmatprep.subr.mxu0 0.0
        %1139 = vmatpush1.msra.mxu0 0.0
        %1140 = vmatprep.subr.mxu0 0.0
        %1141 = vmatpush1.msra.mxu0 0.0
        %1142 = vmatprep.subr.mxu0 0.0
        %1143 = vmatpush1.msra.mxu0 %v1110
        %1144 = vmatprep.subr.mxu0 0.0
        %1145 = vmatpush1.msra.mxu0 %v1109
        %1146 = vmatprep.subr.mxu0 0.0
        %1147 = vmatpush1.msra.mxu0 %v1108
        %1148 = vmatprep.subr.mxu0 0.0
        %1149 = vmatpush1.msra.mxu0 %v1107
        %1150 = vmatprep.subr.mxu0 0.0
        %1151 = vmatpush2.msra.mxu0 0.0
        %1152 = vmatprep.subr.mxu0 0.0
        %1153 = vmatpush2.msra.mxu0 0.0
        %1154 = vmatprep.subr.mxu0 0.0
        %1155 = vmatpush2.msra.mxu0 0.0
        %1156 = vmatprep.subr.mxu0 0.0
        %1157 = vmatpush2.msra.mxu0 0.0
        %1158 = vmatprep.subr.mxu0 0.0
        %1159 = vmatpush2.msra.mxu0 0.0
        %1160 = vmatprep.subr.mxu0 0.0
        %1161 = vmatpush2.msra.mxu0 0.0
        %1162 = vmatprep.subr.mxu0 0.0
        %1163 = vmatpush2.msra.mxu0 0.0
        %1164 = vmatprep.subr.mxu0 0.0
        %1165 = vmatpush2.msra.mxu0 0.0
        %1166 = vmatprep.subr.mxu0 0.0
        %1167 = vmatpush2.msra.mxu0 0.0
        %1168 = vmatprep.subr.mxu0 0.0
        %1169 = vmatpush2.msra.mxu0 0.0
        %1170 = vmatprep.subr.mxu0 0.0
        %1171 = vmatpush2.msra.mxu0 0.0
        %1172 = vmatprep.subr.mxu0 0.0
        %1173 = vmatpush2.msra.mxu0 0.0
        %1174 = vmatprep.subr.mxu0 0.0
        %1175 = vmatpush2.msra.mxu0 0.0
        %1176 = vmatprep.subr.mxu0 0.0
        %1177 = vmatpush2.msra.mxu0 0.0
        %1178 = vmatprep.subr.mxu0 0.0
        %1179 = vmatpush2.msra.mxu0 0.0
        %1180 = vmatprep.subr.mxu0 0.0
        %1181 = vmatpush2.msra.mxu0 0.0
        %1182 = vmatprep.mubr.f32.mxu0 0.0
        %1183 = vmatmul.mubr.f32.gmra.mxu0 %v1116
        %v1184 = vpop.f32.mrf.mxu0
        %v1185 = vadd.f32 %v1114, %v1184
        %v1186 = vpop.f32.mrf.mxu0
        %1187 = vdwg.mxu0
        %v1188 = vadd.f32 %v307, %v1185
        %v1189 = vsel %vm308, %v1188, 0.0
        %1190 = vadd.xlane.f32.xlu0 %v1189
        %v1191 = vpop.xlane.xlu0 %1190
        %v1192 = vmul.f32 %v1191, %v312
        %v1193 = vsub.f32 %v1188, %v1192
        %v1194 = vmul.f32 %v1193, %v1193
        %v1195 = vsel %vm308, %v1194, 0.0
        %1196 = vadd.xlane.f32.xlu0 %v1195
        %v1197 = vpop.xlane.xlu0 %1196
        %v1198 = vmul.f32 %v1197, 0.032258064
        %v1199 = vrsqrt.pop %v1198
        %v1200 = vmul.f32 %v1198, %v1199
        %vm1201 = vcmp.eq.f32.partialorder %v1198, inf
        %v1202 = vsel %vm1201, %v1198, %v1200
        %vm1203 = vcmp.eq.f32.partialorder %v1198, 0.0
        %v1204 = vand.u32 %v1198, 2147483648
        %v1205 = vsel %vm1203, %v1204, %v1202
        %v1206 = vadd.f32 %v1205, 1e-05
        %v1207 = vrcp.pop %v1206
        %v1208 = vmul.f32 %v1193, %v1207
        %v1209 = vlaneseq
        %v1210 = vshrl.u32 %v1209, 7
        %v1211 = vsub.s32 0, %v1210
        %v1212 = vrot.slane %v303, %v1211
        %v1213 = vmul.f32 %v1208, %v1212
        %v1214 = vlaneseq
        %v1215 = vshrl.u32 %v1214, 7
        %v1216 = vsub.s32 0, %v1215
        %v1217 = vrot.slane %v304, %v1216
        %v1218 = vadd.f32 %v1213, %v1217
        %v1219 = vld [vmem:[%s5] sm:$0xff]
        %v1220 = vld [vmem:[%s5 + $0x8] sm:$0xff]
        %v1221 = vld [vmem:[%s5 + $0x10] sm:$0xff]
        %v1222 = vld [vmem:[%s5 + $0x18] sm:$0xff]
        %v1223 = vld [vmem:[%s6] sm:$0x1]
        %v1225 = vlaneseq
        %v1226 = vshrl.u32 %v1225, 7
        %v1227 = vsub.s32 0, %v1226
        %v1228 = vrot.slane %v1223, %v1227
        %v1231 = vsel %vm308, %v1218, 0
        %1233 = vmatprep.subr.mxu0 0.0
        %1234 = vmatpush1.msra.mxu0 0.0
        %1235 = vmatprep.subr.mxu0 0.0
        %1236 = vmatpush1.msra.mxu0 0.0
        %1237 = vmatprep.subr.mxu0 0.0
        %1238 = vmatpush1.msra.mxu0 0.0
        %1239 = vmatprep.subr.mxu0 0.0
        %1240 = vmatpush1.msra.mxu0 0.0
        %1241 = vmatprep.subr.mxu0 0.0
        %1242 = vmatpush1.msra.mxu0 0.0
        %1243 = vmatprep.subr.mxu0 0.0
        %1244 = vmatpush1.msra.mxu0 0.0
        %1245 = vmatprep.subr.mxu0 0.0
        %1246 = vmatpush1.msra.mxu0 0.0
        %1247 = vmatprep.subr.mxu0 0.0
        %1248 = vmatpush1.msra.mxu0 0.0
        %1249 = vmatprep.subr.mxu0 0.0
        %1250 = vmatpush1.msra.mxu0 0.0
        %1251 = vmatprep.subr.mxu0 0.0
        %1252 = vmatpush1.msra.mxu0 0.0
        %1253 = vmatprep.subr.mxu0 0.0
        %1254 = vmatpush1.msra.mxu0 0.0
        %1255 = vmatprep.subr.mxu0 0.0
        %1256 = vmatpush1.msra.mxu0 0.0
        %1257 = vmatprep.subr.mxu0 0.0
        %1258 = vmatpush1.msra.mxu0 %v1222
        %1259 = vmatprep.subr.mxu0 0.0
        %1260 = vmatpush1.msra.mxu0 %v1221
        %1261 = vmatprep.subr.mxu0 0.0
        %1262 = vmatpush1.msra.mxu0 %v1220
        %1263 = vmatprep.subr.mxu0 0.0
        %1264 = vmatpush1.msra.mxu0 %v1219
        %1265 = vmatprep.subr.mxu0 0.0
        %1266 = vmatpush2.msra.mxu0 0.0
        %1267 = vmatprep.subr.mxu0 0.0
        %1268 = vmatpush2.msra.mxu0 0.0
        %1269 = vmatprep.subr.mxu0 0.0
        %1270 = vmatpush2.msra.mxu0 0.0
        %1271 = vmatprep.subr.mxu0 0.0
        %1272 = vmatpush2.msra.mxu0 0.0
        %1273 = vmatprep.subr.mxu0 0.0
        %1274 = vmatpush2.msra.mxu0 0.0
        %1275 = vmatprep.subr.mxu0 0.0
        %1276 = vmatpush2.msra.mxu0 0.0
        %1277 = vmatprep.subr.mxu0 0.0
        %1278 = vmatpush2.msra.mxu0 0.0
        %1279 = vmatprep.subr.mxu0 0.0
        %1280 = vmatpush2.msra.mxu0 0.0
        %1281 = vmatprep.subr.mxu0 0.0
        %1282 = vmatpush2.msra.mxu0 0.0
        %1283 = vmatprep.subr.mxu0 0.0
        %1284 = vmatpush2.msra.mxu0 0.0
        %1285 = vmatprep.subr.mxu0 0.0
        %1286 = vmatpush2.msra.mxu0 0.0
        %1287 = vmatprep.subr.mxu0 0.0
        %1288 = vmatpush2.msra.mxu0 0.0
        %1289 = vmatprep.subr.mxu0 0.0
        %1290 = vmatpush2.msra.mxu0 0.0
        %1291 = vmatprep.subr.mxu0 0.0
        %1292 = vmatpush2.msra.mxu0 0.0
        %1293 = vmatprep.subr.mxu0 0.0
        %1294 = vmatpush2.msra.mxu0 0.0
        %1295 = vmatprep.subr.mxu0 0.0
        %1296 = vmatpush2.msra.mxu0 0.0
        %1297 = vmatprep.mubr.f32.mxu0 0.0
        %1298 = vmatmul.mubr.f32.gmra.mxu0 %v1231
        %v1299 = vpop.f32.mrf.mxu0
        %v1300 = vadd.f32 %v1228, %v1299
        %v1301 = vpop.f32.mrf.mxu0
        %1302 = vdwg.mxu0
        %v1303 = vmul.f32 %v1300, 0.5
        %v1304 = vmul.f32 %v1300, 0.70710677
        %vm1305 = vcmp.ge.f32.partialorder %v1304, 0.0
        %v1306 = vsel %vm1305, 1.0, -1.0
        %v1307 = vand.u32 2147483647, %v1304
        %v1308 = vmul.f32 %v1307, 0.3275911
        %v1309 = vadd.f32 %v1308, 1.0
        %v1310 = vrcp.pop %v1309
        %v1311 = vmul.f32 %v1310, 1.0614054
        %v1312 = vadd.f32 %v1311, -1.4531521
        %v1313 = vmul.f32 %v1310, %v1312
        %v1314 = vadd.f32 %v1313, 1.4214138
        %v1315 = vmul.f32 %v1310, %v1314
        %v1316 = vadd.f32 %v1315, -0.28449672
        %v1317 = vmul.f32 %v1310, %v1316
        %v1318 = vadd.f32 %v1317, 0.2548296
        %v1319 = vmul.f32 %v1310, %v1318
        %v1320 = vsub.f32 0.0, %v1307
        %v1321 = vmul.f32 %v1320, %v1307
        %v1322 = vmul.f32 %v1321, 1.442695
        %v1323 = vpow.pop %v1322
        %v1324 = vmul.f32 %v1319, %v1323
        %v1325 = vsub.f32 1.0, %v1324
        %v1326 = vmul.f32 %v1306, %v1325
        %v1327 = vadd.f32 %v1326, 1.0
        %v1328 = vmul.f32 %v1303, %v1327
        %v1329 = vld [vmem:[%s7] sm:$0xff]
        %v1330 = vld [vmem:[%s7 + $0x8] sm:$0xff]
        %v1331 = vld [vmem:[%s7 + $0x10] sm:$0xff]
        %v1332 = vld [vmem:[%s7 + $0x18] sm:$0xff]
        %v1333 = vld [vmem:[%s7 + $0x20] sm:$0xff]
        %v1334 = vld [vmem:[%s7 + $0x28] sm:$0xff]
        %v1335 = vld [vmem:[%s7 + $0x30] sm:$0xff]
        %v1336 = vld [vmem:[%s7 + $0x38] sm:$0xff]
        %v1337 = vld [vmem:[%s7 + $0x40] sm:$0xff]
        %v1338 = vld [vmem:[%s7 + $0x48] sm:$0xff]
        %v1339 = vld [vmem:[%s7 + $0x50] sm:$0xff]
        %v1340 = vld [vmem:[%s7 + $0x58] sm:$0xff]
        %v1341 = vld [vmem:[%s7 + $0x60] sm:$0xff]
        %v1342 = vld [vmem:[%s7 + $0x68] sm:$0xff]
        %v1343 = vld [vmem:[%s7 + $0x70] sm:$0xff]
        %v1344 = vld [vmem:[%s7 + $0x78] sm:$0xff]
        %v1345 = vlaneseq
        %v1346 = vshrl.u32 %v1345, 7
        %v1347 = vsub.s32 0, %v1346
        %v1348 = vrot.slane %v306, %v1347
        %1349 = vmatprep.subr.mxu0 0.0
        %1350 = vmatpush1.msra.mxu0 %v1344
        %1351 = vmatprep.subr.mxu0 0.0
        %1352 = vmatpush1.msra.mxu0 %v1343
        %1353 = vmatprep.subr.mxu0 0.0
        %1354 = vmatpush1.msra.mxu0 %v1342
        %1355 = vmatprep.subr.mxu0 0.0
        %1356 = vmatpush1.msra.mxu0 %v1341
        %1357 = vmatprep.subr.mxu0 0.0
        %1358 = vmatpush1.msra.mxu0 %v1340
        %1359 = vmatprep.subr.mxu0 0.0
        %1360 = vmatpush1.msra.mxu0 %v1339
        %1361 = vmatprep.subr.mxu0 0.0
        %1362 = vmatpush1.msra.mxu0 %v1338
        %1363 = vmatprep.subr.mxu0 0.0
        %1364 = vmatpush1.msra.mxu0 %v1337
        %1365 = vmatprep.subr.mxu0 0.0
        %1366 = vmatpush1.msra.mxu0 %v1336
        %1367 = vmatprep.subr.mxu0 0.0
        %1368 = vmatpush1.msra.mxu0 %v1335
        %1369 = vmatprep.subr.mxu0 0.0
        %1370 = vmatpush1.msra.mxu0 %v1334
        %1371 = vmatprep.subr.mxu0 0.0
        %1372 = vmatpush1.msra.mxu0 %v1333
        %1373 = vmatprep.subr.mxu0 0.0
        %1374 = vmatpush1.msra.mxu0 %v1332
        %1375 = vmatprep.subr.mxu0 0.0
        %1376 = vmatpush1.msra.mxu0 %v1331
        %1377 = vmatprep.subr.mxu0 0.0
        %1378 = vmatpush1.msra.mxu0 %v1330
        %1379 = vmatprep.subr.mxu0 0.0
        %1380 = vmatpush1.msra.mxu0 %v1329
        %1381 = vmatprep.subr.mxu0 0.0
        %1382 = vmatpush2.msra.mxu0 0.0
        %1383 = vmatprep.subr.mxu0 0.0
        %1384 = vmatpush2.msra.mxu0 0.0
        %1385 = vmatprep.subr.mxu0 0.0
        %1386 = vmatpush2.msra.mxu0 0.0
        %1387 = vmatprep.subr.mxu0 0.0
        %1388 = vmatpush2.msra.mxu0 0.0
        %1389 = vmatprep.subr.mxu0 0.0
        %1390 = vmatpush2.msra.mxu0 0.0
        %1391 = vmatprep.subr.mxu0 0.0
        %1392 = vmatpush2.msra.mxu0 0.0
        %1393 = vmatprep.subr.mxu0 0.0
        %1394 = vmatpush2.msra.mxu0 0.0
        %1395 = vmatprep.subr.mxu0 0.0
        %1396 = vmatpush2.msra.mxu0 0.0
        %1397 = vmatprep.subr.mxu0 0.0
        %1398 = vmatpush2.msra.mxu0 0.0
        %1399 = vmatprep.subr.mxu0 0.0
        %1400 = vmatpush2.msra.mxu0 0.0
        %1401 = vmatprep.subr.mxu0 0.0
        %1402 = vmatpush2.msra.mxu0 0.0
        %1403 = vmatprep.subr.mxu0 0.0
        %1404 = vmatpush2.msra.mxu0 0.0
        %1405 = vmatprep.subr.mxu0 0.0
        %1406 = vmatpush2.msra.mxu0 0.0
        %1407 = vmatprep.subr.mxu0 0.0
        %1408 = vmatpush2.msra.mxu0 0.0
        %1409 = vmatprep.subr.mxu0 0.0
        %1410 = vmatpush2.msra.mxu0 0.0
        %1411 = vmatprep.subr.mxu0 0.0
        %1412 = vmatpush2.msra.mxu0 0.0
        %1413 = vmatprep.mubr.f32.mxu0 0.0
        %1414 = vmatmul.mubr.f32.gmra.mxu0 %v1328
        %v1415 = vpop.f32.mrf.mxu0
        %v1416 = vadd.f32 %v1348, %v1415
        %v1417 = vpop.f32.mrf.mxu0
        %1418 = vdwg.mxu0
        %v1419 = vadd.f32 %v1416, %v1188
        %1420 = vst.msk [vmem:[%s296] sm:$0xff] %vm308, %v1419
        %s1421 = sand.u32 %s203, 1
        %s1422 = scalar_lea.sflag [#allocation3], %s1421
        %s1423 = sand.u32 %s203, 1
        %s1424 = smul.addr %s1423, 8
        %s1425 = scalar_lea.vmem [#allocation2], %s1424
        // Predicated region
        $region53: #{transformer_block.1} parent=51 // pred_check
          %p1426 = pneg %p213
        $region54: #{transformer_block.1} parent=51 // pred_check_branch
          %1428 = sbr.rel (%p1426) target = $region56
        $region55: #{transformer_block.1} parent=51 // pred_region
          %s1430 = ssub.s32 128, 128
          %1431 = vsyncadd %s1422, %s1430
          %s1432 = smul.addr %s22, 128
          %s1433 = scalar_lea.hbm %s8, %s1432
          %s1435 = sshll.u32 %s1425, 4
          %s1436 = int_to_ptr.vmem [resolvable:$true] %s1435
          %1438 = dma.vmem_to_hbm [thread:$0]  %s1436, 128, %s1433, %s1422
        $region56: #{transformer_block.1} parent=51 // pred_fallthru
          _
      $region52: #{transformer_block.1} parent=5 // pred_fallthru
        _
      %p1439 = scmp.le.s32.totalorder 2, %s17
      // Predicated region
      $region57: #{transformer_block.1} parent=5 // pred_check
        %p1440 = pneg %p1439
      $region58: #{transformer_block.1} parent=5 // pred_check_branch
        %1442 = sbr.rel (%p1440) target = $region60
      $region59: #{transformer_block.1} parent=5 // pred_region
        %s1443 = ssub.s32 %s17, 2
        // Predicated region
        $region61: #{transformer_block.1} parent=59 // pred_check
          %p1444 = pneg %p219
        $region62: #{transformer_block.1} parent=59 // pred_check_branch
          %1446 = sbr.rel (%p1444) target = $region64
        $region63: #{transformer_block.1} parent=59 // pred_region
          %s1447 = sand.u32 %s204, 1
          %s1448 = scalar_lea.sflag [#allocation3], %s1447
          %s1449 = sand.u32 %s204, 1
          %s1450 = smul.addr %s1449, 8
          %s1451 = scalar_lea.vmem [#allocation2], %s1450
          %1452 = dma.done %s1448, 128
        $region64: #{transformer_block.1} parent=59 // pred_fallthru
          _
      $region60: #{transformer_block.1} parent=5 // pred_fallthru
        _
    $region6: #{transformer_block.1} parent=1 // loop_footer
      %s21 = sadd.s32 1, %s17
    $region7: #{transformer_block.1} parent=1 // loop_footer_branch
      %16 = sbr.rel target = $region3
    $region8: #{transformer_block.1} parent=1 // loop_exit
      _
    %1453 = vsyncpa [#allocation3], 1
    %s1454 = scalar_lea.sflag [#allocation3], 1
    %1455 = vsyncpa %s1454, 1

</llo_original>
